<compile_context>
chip_gen: v7x
topology: tpu7x:2x2x1
jax: 0.10.0
libtpu: 0.0.40
codegen_flags: <defaults>
</compile_context>

<pallas_src>
import jax
import jax.numpy as jnp
from jax.experimental import pallas as pl
from jax.experimental.pallas import tpu as pltpu


def _round_up(x, m):
    return ((x + m - 1) // m) * m


# ----------------------------------------------------------------------------
# Kernel
# ----------------------------------------------------------------------------
def attn_decoder_kernel(x_ref, enc_ref, s0_ref, wg_ref, ws_ref, b_ref,
                        out_ref, attnw_ref, sout_ref, z1_ref):
    f32 = jnp.float32
    bf16 = jnp.bfloat16
    GW = wg_ref.shape[1]            # 4 * H (== 128, dense gate packing)
    H = GW // 4
    T = x_ref.shape[0]
    Ip8 = x_ref.shape[1]
    S = enc_ref.shape[0]
    Sp = attnw_ref.shape[2]

    # Row offsets into the gate / output-linear slab (must match prepare_params).
    R_W1X, R_W1H = 0 * H, 1 * H
    R_W2A, R_W2B, R_W2H = 2 * H, 3 * H, 4 * H
    R_W3A, R_W3B, R_W3H = 5 * H, 6 * H, 7 * H
    R_LIN = 8 * H
    # Row offsets into the small-weights slab.
    R_PN1 = 0
    R_PN2 = R_PN1 + Ip8
    R_A1 = R_PN2 + H
    R_A2 = R_A1 + H
    R_A3 = R_A2 + H

    # ---- loop-invariant values, hoisted out of the recurrence ----
    b1 = b_ref[0:1, :]
    b2 = b_ref[1:2, :]
    b3 = b_ref[2:3, :]
    bpn1 = b_ref[3:4, :]
    bpn2 = b_ref[4:5, :]
    ba2 = b_ref[5:6, :]
    blin = b_ref[6:7, :]
    a3row = ws_ref[R_A3:R_A3 + 1, :]                 # (1, GW) bf16
    enc_v = enc_ref[...]                             # (S, H)  bf16

    glane = jax.lax.broadcasted_iota(jnp.int32, (1, GW), 1)
    gmask = (glane >= 2 * H) & (glane < 3 * H)       # tanh lanes of the gate vreg
    attn_zpad = jnp.zeros((1, Sp - S), f32) if Sp > S else None

    # pn1 -> relu -> pn2 -> relu for ALL steps (state independent, batched with
    # M=T), then fold the x-side of lstm1 (po6 @ W1x + b1) in as well so the
    # per-step lstm1 work is just h1 @ W1h.  (dropout1/dropout2 = identity.)
    xb = x_ref[...].astype(bf16)
    po2 = jnp.maximum(
        jnp.dot(xb, ws_ref[R_PN1:R_PN1 + Ip8, :],
                preferred_element_type=f32) + bpn1, 0.0)
    po6 = jnp.maximum(
        jnp.dot(po2[:, :H].astype(bf16), ws_ref[R_PN2:R_PN2 + H, :],
                preferred_element_type=f32) + bpn2, 0.0)
    z1_ref[...] = jnp.dot(po6[:, :H].astype(bf16), wg_ref[R_W1X:R_W1X + H, :],
                          preferred_element_type=f32) + b1

    # Loop-invariant encoder projection (attn2), hoisted.
    uah = jnp.dot(enc_v, ws_ref[R_A2:R_A2 + H, :],
                  preferred_element_type=f32) + ba2                 # (S, GW)

    def cell(pre, c):
        # PyTorch gate order i, f, g, o packed densely into one 128-lane block.
        act = jnp.where(gmask, jnp.tanh(pre), jax.nn.sigmoid(pre))
        i = act[:, 0:H]
        f = act[:, H:2 * H]
        g = act[:, 2 * H:3 * H]
        o = act[:, 3 * H:4 * H]
        cn = f * c + i * g
        return o * jnp.tanh(cn), cn

    def step(t, carry):
        h1, c1, h2, c2, h3, c3 = carry

        # lstm1: x-side precomputed in z1; only the recurrent matmul remains.
        g1 = z1_ref[pl.ds(t, 1), :] + jnp.dot(
            h1.astype(bf16), wg_ref[R_W1H:R_W1H + H, :],
            preferred_element_type=f32)
        h1n, c1n = cell(g1, c1)
        o2 = h1n
        o2b = o2.astype(bf16)

        # additive attention
        way = jnp.dot(o2b, ws_ref[R_A1:R_A1 + H, :],
                      preferred_element_type=f32)                   # (1, GW)
        beta = jnp.tanh(way + uah)                                  # (S, GW)
        gamma = jax.lax.dot_general(                                # (1, S)
            a3row, beta.astype(bf16), (((1,), (1,)), ((), ())),
            preferred_element_type=f32)
        m = jnp.max(gamma, axis=-1, keepdims=True)
        e = jnp.exp(gamma - m)
        attnw = e * pl.reciprocal(jnp.sum(e, axis=-1, keepdims=True),
                                  approx=True)                      # (1, S)
        if Sp > S:
            attnw_ref[t] = jnp.concatenate([attnw, attn_zpad], axis=1)
        else:
            attnw_ref[t] = attnw
        attn = jnp.dot(attnw.astype(bf16), enc_v,
                       preferred_element_type=f32)                  # (1, H)
        attnb = attn.astype(bf16)

        # lstm2 on cat(o2, attn): split accumulating dots against dense blocks.
        g2 = (jnp.dot(o2b, wg_ref[R_W2A:R_W2A + H, :],
                      preferred_element_type=f32)
              + jnp.dot(attnb, wg_ref[R_W2B:R_W2B + H, :],
                        preferred_element_type=f32)
              + jnp.dot(h2.astype(bf16), wg_ref[R_W2H:R_W2H + H, :],
                        preferred_element_type=f32)
              + b2)
        h2n, c2n = cell(g2, c2)

        # o6 = cat(o5, attn) + cat(o2, attn) = cat(o5 + o2, 2 * attn)
        g3 = (jnp.dot((h2n + o2).astype(bf16), wg_ref[R_W3A:R_W3A + H, :],
                      preferred_element_type=f32)
              + jnp.dot((attn + attn).astype(bf16), wg_ref[R_W3B:R_W3B + H, :],
                        preferred_element_type=f32)
              + jnp.dot(h3.astype(bf16), wg_ref[R_W3H:R_W3H + H, :],
                        preferred_element_type=f32)
              + b3)
        h3n, c3n = cell(g3, c3)

        # fused linear1/linear2 -> one matmul, one lane-dense 128-wide store
        out_ref[t] = (jnp.dot(h3n.astype(bf16), wg_ref[R_LIN:R_LIN + H, :],
                              preferred_element_type=f32) + blin)
        return (h1n, c1n, h2n, c2n, h3n, c3n)

    init = tuple(s0_ref[i:i + 1, :] for i in range(6))
    if T <= 32:
        # Full static unroll: cross-step scheduler visibility and every slice
        # index is a compile-time constant.
        carry = init
        for t in range(T):
            carry = step(t, carry)
    else:
        carry = jax.lax.fori_loop(0, T, step, init, unroll=4)
    h1, c1, h2, c2, h3, c3 = carry

    # One stacked epilogue store instead of six masked row stores.
    sout_ref[...] = jnp.concatenate(
        [h1, c1, h2, c2, h3, c3, jnp.zeros((2, H), f32)], axis=0)


# ----------------------------------------------------------------------------
# One-time parameter packing (done outside the hot path)
# ----------------------------------------------------------------------------
def prepare_params(params, input_size, hidden_size, output_size):
    """Pack every weight/bias once into small, dense, bf16 slabs.

    NOTE: the zero padding of every weight column/row beyond the true H/I/O
    extents is load-bearing - it is what keeps padded lanes of every
    intermediate exactly zero inside the kernel."""
    H, I, O = hidden_size, input_size, output_size
    GW = 4 * H
    assert GW == 128, "dense gate packing assumes 4*hidden_size == 128 lanes"
    assert H % 8 == 0 and 2 * O <= GW
    Ip8 = _round_up(I, 8)
    f32 = jnp.float32
    bf16 = jnp.bfloat16
    T_ = jnp.transpose

    def pad_cols(a):
        r, c = a.shape
        return jnp.zeros((r, GW), f32).at[:, :c].set(a.astype(f32))

    def pad_rows(a, rows):
        r, c = a.shape
        return jnp.zeros((rows, c), f32).at[:r, :].set(a)

    # ---- gate / output-linear slab: nine dense (H, 4H) blocks, width 128 ----
    lin = jnp.zeros((H, GW), f32)
    lin = lin.at[:, :O].set(T_(params["lin1_w"]))
    lin = lin.at[:, O:2 * O].set(T_(params["lin2_w"]))
    wg = jnp.concatenate([
        T_(params["l1_wih"]),               # R_W1X
        T_(params["l1_whh"]),               # R_W1H
        T_(params["l2_wih"][:, :H]),        # R_W2A  (o2 segment)
        T_(params["l2_wih"][:, H:2 * H]),   # R_W2B  (attn segment)
        T_(params["l2_whh"]),               # R_W2H
        T_(params["l3_wih"][:, :H]),        # R_W3A  (o5+o2 segment)
        T_(params["l3_wih"][:, H:2 * H]),   # R_W3B  (2*attn segment)
        T_(params["l3_whh"]),               # R_W3H
        lin,                                # R_LIN  (fused linear1/linear2)
    ], axis=0)

    # ---- small-weights slab (pn1, pn2, attn1, attn2, attn3), width 128 ----
    ws = jnp.concatenate([
        pad_rows(pad_cols(T_(params["pn1_w"])), Ip8),   # R_PN1
        pad_cols(T_(params["pn2_w"])),                  # R_PN2
        pad_cols(T_(params["attn1_w"])),                # R_A1
        pad_cols(T_(params["attn2_w"])),                # R_A2
        pad_rows(pad_cols(params["attn3_w"]), 8),       # R_A3 (row 0)
    ], axis=0)

    # ---- bias slab (8, 128), kept f32 ----
    def pad_vec(v):
        return jnp.zeros((GW,), f32).at[:v.shape[0]].set(v)

    b_slab = jnp.stack([
        params["l1_bih"] + params["l1_bhh"],
        params["l2_bih"] + params["l2_bhh"],
        params["l3_bih"] + params["l3_bhh"],
        pad_vec(params["pn1_b"]),
        pad_vec(params["pn2_b"]),
        pad_vec(params["attn2_b"]),
        pad_vec(jnp.concatenate([params["lin1_b"], params["lin2_b"]])),
        jnp.zeros((GW,), f32),
    ], axis=0)

    return dict(wg=wg.astype(bf16), ws=ws.astype(bf16), b=b_slab.astype(f32),
                H=H, I=I, O=O, Ip8=Ip8, GW=GW)


# ----------------------------------------------------------------------------
# Wrappers
# ----------------------------------------------------------------------------
def attn_decoder_decode(prep, inputs, h1, c1, h2, c2, h3, c3, encoder_outputs):
    """Run T decoder steps inside ONE kernel launch (weights stay in VMEM).

    inputs: (T, I).  Returns (output (T,2O), o11 (T,O), h1..c3 final (1,1,H),
    attn_weights (T,S))."""
    H, I, O = prep["H"], prep["I"], prep["O"]
    Ip8, GW = prep["Ip8"], prep["GW"]
    f32 = jnp.float32
    T = inputs.shape[0]
    S = encoder_outputs.shape[0]
    Sp = _round_up(S, 128)

    x_p = jnp.zeros((T, Ip8), f32).at[:, :I].set(inputs.astype(f32))
    enc_b = encoder_outputs.astype(jnp.bfloat16)
    states = jnp.stack([h1.reshape(H), c1.reshape(H), h2.reshape(H),
                        c2.reshape(H), h3.reshape(H), c3.reshape(H)], axis=0)
    s0 = jnp.zeros((8, H), f32).at[:6, :].set(states.astype(f32))

    vmem = pl.BlockSpec(memory_space=pltpu.MemorySpace.VMEM)
    out, attnw, sout = pl.pallas_call(
        attn_decoder_kernel,
        out_shape=(
            jax.ShapeDtypeStruct((T, 1, GW), f32),   # fused cat(o10,o11), padded
            jax.ShapeDtypeStruct((T, 1, Sp), f32),   # attn weights, lane-padded
            jax.ShapeDtypeStruct((8, H), f32),       # final h1,c1,h2,c2,h3,c3
        ),
        in_specs=[vmem] * 6,
        out_specs=(vmem, vmem, vmem),
        scratch_shapes=[pltpu.VMEM((T, GW), f32)],   # hoisted lstm1 x-side proj
    )(x_p, enc_b, s0, prep["wg"], prep["ws"], prep["b"])

    out = out.reshape(T, GW)
    output = out[:, :2 * O]
    o11 = out[:, O:2 * O]
    attn_weights = attnw.reshape(T, Sp)[:, :S]
    st = sout[:6, :]
    h1n, c1n, h2n, c2n, h3n, c3n = [st[i].reshape(1, 1, H) for i in range(6)]
    return output, o11, h1n, c1n, h2n, c2n, h3n, c3n, attn_weights


def attn_decoder_forward(prep, inp, h1, c1, h2, c2, h3, c3, encoder_outputs):
    """Single-step call matching AttnDecoderRNN.forward's return signature."""
    return attn_decoder_decode(prep, inp.reshape(1, -1),
                               h1, c1, h2, c2, h3, c3, encoder_outputs)


# ----------------------------------------------------------------------------
# Plain-JAX reference (for in-script validation) and parameter init
# ----------------------------------------------------------------------------
def reference_forward(params, inp, h1, c1, h2, c2, h3, c3, enc):
    def lstm(x, h, c, wih, whh, bih, bhh):
        H = h.shape[-1]
        g = x @ wih.T + h @ whh.T + bih + bhh
        i = jax.nn.sigmoid(g[:, :H]); f = jax.nn.sigmoid(g[:, H:2 * H])
        gg = jnp.tanh(g[:, 2 * H:3 * H]); o = jax.nn.sigmoid(g[:, 3 * H:4 * H])
        c = f * c + i * gg
        return o * jnp.tanh(c), c

    H = h1.shape[-1]
    h1 = h1.reshape(1, H); c1 = c1.reshape(1, H)
    h2 = h2.reshape(1, H); c2 = c2.reshape(1, H)
    h3 = h3.reshape(1, H); c3 = c3.reshape(1, H)

    po2 = jax.nn.relu(inp @ params["pn1_w"].T + params["pn1_b"])
    po6 = jax.nn.relu(po2 @ params["pn2_w"].T + params["pn2_b"])
    h1, c1 = lstm(po6, h1, c1, params["l1_wih"], params["l1_whh"],
                  params["l1_bih"], params["l1_bhh"])
    o2 = h1
    way = o2 @ params["attn1_w"].T
    uah = enc @ params["attn2_w"].T + params["attn2_b"]
    beta = jnp.tanh(way + uah)
    gamma = beta @ params["attn3_w"].T
    attn_w = jax.nn.softmax(gamma.T, axis=-1)
    attn = attn_w @ enc
    o3 = jnp.concatenate([o2, attn], axis=1)
    h2, c2 = lstm(o3, h2, c2, params["l2_wih"], params["l2_whh"],
                  params["l2_bih"], params["l2_bhh"])
    o6 = jnp.concatenate([h2, attn], axis=1) + o3
    h3, c3 = lstm(o6, h3, c3, params["l3_wih"], params["l3_whh"],
                  params["l3_bih"], params["l3_bhh"])
    o9 = h3
    o10 = o9 @ params["lin1_w"].T + params["lin1_b"]
    o11 = o9 @ params["lin2_w"].T + params["lin2_b"]
    output = jnp.concatenate([o10, o11], axis=1)
    return output, o11, h1, c1, h2, c2, h3, c3, attn_w


def init_params(key, input_size, hidden_size, output_size, std=0.01):
    """normal(0, 0.01) everywhere (biases made non-zero so the test also
    exercises the bias-packing paths)."""
    H, I, O = hidden_size, input_size, output_size
    ks = jax.random.split(key, 24)
    n = lambda k, shape: std * jax.random.normal(k, shape, jnp.float32)
    return dict(
        pn1_w=n(ks[0], (H, I)), pn1_b=n(ks[13], (H,)),
        pn2_w=n(ks[1], (H, H)), pn2_b=n(ks[14], (H,)),
        attn1_w=n(ks[2], (H, H)),
        attn2_w=n(ks[3], (H, H)), attn2_b=n(ks[15], (H,)),
        attn3_w=n(ks[4], (1, H)),
        l1_wih=n(ks[5], (4 * H, H)), l1_whh=n(ks[6], (4 * H, H)),
        l1_bih=n(ks[16], (4 * H,)), l1_bhh=n(ks[17], (4 * H,)),
        l2_wih=n(ks[7], (4 * H, 2 * H)), l2_whh=n(ks[8], (4 * H, H)),
        l2_bih=n(ks[18], (4 * H,)), l2_bhh=n(ks[19], (4 * H,)),
        l3_wih=n(ks[9], (4 * H, 2 * H)), l3_whh=n(ks[10], (4 * H, H)),
        l3_bih=n(ks[20], (4 * H,)), l3_bhh=n(ks[21], (4 * H,)),
        lin1_w=n(ks[11], (O, H)), lin1_b=n(ks[22], (O,)),
        lin2_w=n(ks[12], (O, H)), lin2_b=n(ks[23], (O,)),
    )


if __name__ == "__main__":
    INPUT, HIDDEN, OUTPUT, SEQ = 16, 32, 16, 8     # batch = 1 (implied by module)

    key = jax.random.PRNGKey(0)
    kp, kd = jax.random.split(key)
    params = init_params(kp, INPUT, HIDDEN, OUTPUT)
    prep = prepare_params(params, INPUT, HIDDEN, OUTPUT)   # one-time packing

    ks = jax.random.split(kd, 9)
    inp = jax.random.normal(ks[0], (1, INPUT), jnp.float32)
    h1 = jax.random.normal(ks[1], (1, 1, HIDDEN), jnp.float32)
    c1 = jax.random.normal(ks[2], (1, 1, HIDDEN), jnp.float32)
    h2 = jax.random.normal(ks[3], (1, 1, HIDDEN), jnp.float32)
    c2 = jax.random.normal(ks[4], (1, 1, HIDDEN), jnp.float32)
    h3 = jax.random.normal(ks[5], (1, 1, HIDDEN), jnp.float32)
    c3 = jax.random.normal(ks[6], (1, 1, HIDDEN), jnp.float32)
    enc = jax.random.normal(ks[7], (SEQ, HIDDEN), jnp.float32)

    # ---- single-step forward (matches the PyTorch module's forward) ----
    outs = attn_decoder_forward(prep, inp, h1, c1, h2, c2, h3, c3, enc)
    outs = jax.block_until_ready(outs)

    assert outs[0].shape == (1, 2 * OUTPUT)
    assert outs[1].shape == (1, OUTPUT)
    assert outs[8].shape == (1, SEQ)
    assert all(s.shape == (1, 1, HIDDEN) for s in outs[2:8])
    assert bool(jnp.all(jnp.isfinite(outs[0])))
    # approx-reciprocal softmax -> sum-to-1 only up to EUP approximation error
    assert bool(jnp.allclose(jnp.sum(outs[8], axis=-1), 1.0, atol=2e-3))

    # ---- validate against a plain-JAX (f32) reference of the module ----
    ref = reference_forward(params, inp, h1, c1, h2, c2, h3, c3, enc)

    def close(a, b):
        return bool(jnp.allclose(jnp.asarray(a).reshape(jnp.asarray(b).shape),
                                 b, atol=2e-3, rtol=2e-2))

    assert close(outs[0], ref[0]), "output mismatch"
    assert close(outs[1], ref[1]), "o11 mismatch"
    assert close(outs[8], ref[8]), "attn_weights mismatch"
    for i in range(2, 8):
        assert close(outs[i], ref[i]), f"state {i} mismatch"

    # ---- multi-step decode: whole loop in one launch, weights stay in VMEM ----
    xs = jnp.concatenate(
        [inp, jax.random.normal(ks[8], (3, INPUT), jnp.float32)], axis=0)
    dec = attn_decoder_decode(prep, xs, h1, c1, h2, c2, h3, c3, enc)
    dec = jax.block_until_ready(dec)
    assert dec[0].shape == (4, 2 * OUTPUT)
    assert bool(jnp.all(jnp.isfinite(dec[0])))
    # step 0 of the in-kernel loop must reproduce the single-step forward
    assert bool(jnp.allclose(dec[0][0:1], outs[0], atol=1e-5))
    assert bool(jnp.allclose(dec[8][0:1], outs[8], atol=1e-5))

    print("KERNEL_OK")
</pallas_src>

<mosaic_0001>
module attributes {stable_mosaic.version = 11 : i64} {
  func.func @attn_decoder_kernel(%arg0: memref<1x16xf32, #tpu.memory_space<vmem>>, %arg1: memref<8x32xbf16, #tpu.memory_space<vmem>>, %arg2: memref<8x32xf32, #tpu.memory_space<vmem>>, %arg3: memref<288x128xbf16, #tpu.memory_space<vmem>>, %arg4: memref<120x128xbf16, #tpu.memory_space<vmem>>, %arg5: memref<8x128xf32, #tpu.memory_space<vmem>>, %arg6: memref<1x1x128xf32, #tpu.memory_space<vmem>>, %arg7: memref<1x1x128xf32, #tpu.memory_space<vmem>>, %arg8: memref<8x32xf32, #tpu.memory_space<vmem>>, %arg9: memref<1x128xf32, #tpu.memory_space<vmem>>) attributes {dimension_semantics = [], scalar_prefetch = 0 : i64, scratch_operands = 1 : i64, tpu.core_type = #tpu.core_type<tc>} {
    %c0 = arith.constant 0 : index
    %c0_0 = arith.constant 0 : index
    %0 = vector.load %arg5[%c0, %c0_0] : memref<8x128xf32, #tpu.memory_space<vmem>>, vector<1x128xf32>
    %c1 = arith.constant 1 : index
    %c0_1 = arith.constant 0 : index
    %1 = vector.load %arg5[%c1, %c0_1] : memref<8x128xf32, #tpu.memory_space<vmem>>, vector<1x128xf32>
    %c2 = arith.constant 2 : index
    %c0_2 = arith.constant 0 : index
    %2 = vector.load %arg5[%c2, %c0_2] : memref<8x128xf32, #tpu.memory_space<vmem>>, vector<1x128xf32>
    %c3 = arith.constant 3 : index
    %c0_3 = arith.constant 0 : index
    %3 = vector.load %arg5[%c3, %c0_3] : memref<8x128xf32, #tpu.memory_space<vmem>>, vector<1x128xf32>
    %c4 = arith.constant 4 : index
    %c0_4 = arith.constant 0 : index
    %4 = vector.load %arg5[%c4, %c0_4] : memref<8x128xf32, #tpu.memory_space<vmem>>, vector<1x128xf32>
    %c5 = arith.constant 5 : index
    %c0_5 = arith.constant 0 : index
    %5 = vector.load %arg5[%c5, %c0_5] : memref<8x128xf32, #tpu.memory_space<vmem>>, vector<1x128xf32>
    %c6 = arith.constant 6 : index
    %c0_6 = arith.constant 0 : index
    %6 = vector.load %arg5[%c6, %c0_6] : memref<8x128xf32, #tpu.memory_space<vmem>>, vector<1x128xf32>
    %c112 = arith.constant 112 : index
    %c0_7 = arith.constant 0 : index
    %7 = vector.load %arg4[%c112, %c0_7] : memref<120x128xbf16, #tpu.memory_space<vmem>>, vector<1x128xbf16>
    %c0_8 = arith.constant 0 : index
    %c0_9 = arith.constant 0 : index
    %8 = vector.load %arg1[%c0_8, %c0_9] : memref<8x32xbf16, #tpu.memory_space<vmem>>, vector<8x32xbf16>
    %9 = tpu.iota {dimensions = array<i32: 1>} : vector<1x128xi32>
    %c64_i32 = arith.constant 64 : i32
    %10 = vector.broadcast %c64_i32 : i32 to vector<1x128xi32>
    %11 = arith.cmpi sge, %9, %10 : vector<1x128xi32>
    %c96_i32 = arith.constant 96 : i32
    %12 = vector.broadcast %c96_i32 : i32 to vector<1x128xi32>
    %13 = arith.cmpi slt, %9, %12 : vector<1x128xi32>
    %14 = arith.andi %11, %13 : vector<1x128xi1>
    %cst = arith.constant 0.000000e+00 : f32
    %15 = vector.broadcast %cst : f32 to vector<1x120xf32>
    %c0_10 = arith.constant 0 : index
    %c0_11 = arith.constant 0 : index
    %16 = vector.load %arg0[%c0_10, %c0_11] : memref<1x16xf32, #tpu.memory_space<vmem>>, vector<1x16xf32>
    %17 = arith.truncf %16 : vector<1x16xf32> to vector<1x16xbf16>
    %c0_12 = arith.constant 0 : index
    %c0_13 = arith.constant 0 : index
    %18 = vector.load %arg4[%c0_12, %c0_13] : memref<120x128xbf16, #tpu.memory_space<vmem>>, vector<16x128xbf16>
    %cst_14 = arith.constant dense<0.000000e+00> : vector<1x128xf32>
    %19 = tpu.matmul %17, %18, %cst_14 {dimension_numbers = #tpu.dot_dimension_numbers<[1], [0], [0], [1], [0, 0, 1, 1], [], []>} : vector<1x16xbf16>, vector<16x128xbf16>, vector<1x128xf32> -> vector<1x128xf32>
    %20 = arith.addf %19, %3 : vector<1x128xf32>
    %cst_15 = arith.constant 0.000000e+00 : f32
    %21 = vector.broadcast %cst_15 : f32 to vector<1x128xf32>
    %22 = arith.maximumf %20, %21 : vector<1x128xf32>
    %23 = vector.extract_strided_slice %22 {offsets = [0, 0], sizes = [1, 32], strides = [1, 1]} : vector<1x128xf32> to vector<1x32xf32>
    %24 = arith.truncf %23 : vector<1x32xf32> to vector<1x32xbf16>
    %c16 = arith.constant 16 : index
    %c0_16 = arith.constant 0 : index
    %25 = vector.load %arg4[%c16, %c0_16] : memref<120x128xbf16, #tpu.memory_space<vmem>>, vector<32x128xbf16>
    %cst_17 = arith.constant dense<0.000000e+00> : vector<1x128xf32>
    %26 = tpu.matmul %24, %25, %cst_17 {dimension_numbers = #tpu.dot_dimension_numbers<[1], [0], [0], [1], [0, 0, 1, 1], [], []>} : vector<1x32xbf16>, vector<32x128xbf16>, vector<1x128xf32> -> vector<1x128xf32>
    %27 = arith.addf %26, %4 : vector<1x128xf32>
    %cst_18 = arith.constant 0.000000e+00 : f32
    %28 = vector.broadcast %cst_18 : f32 to vector<1x128xf32>
    %29 = arith.maximumf %27, %28 : vector<1x128xf32>
    %30 = vector.extract_strided_slice %29 {offsets = [0, 0], sizes = [1, 32], strides = [1, 1]} : vector<1x128xf32> to vector<1x32xf32>
    %31 = arith.truncf %30 : vector<1x32xf32> to vector<1x32xbf16>
    %c0_19 = arith.constant 0 : index
    %c0_20 = arith.constant 0 : index
    %32 = vector.load %arg3[%c0_19, %c0_20] : memref<288x128xbf16, #tpu.memory_space<vmem>>, vector<32x128xbf16>
    %cst_21 = arith.constant dense<0.000000e+00> : vector<1x128xf32>
    %33 = tpu.matmul %31, %32, %cst_21 {dimension_numbers = #tpu.dot_dimension_numbers<[1], [0], [0], [1], [0, 0, 1, 1], [], []>} : vector<1x32xbf16>, vector<32x128xbf16>, vector<1x128xf32> -> vector<1x128xf32>
    %34 = arith.addf %33, %0 : vector<1x128xf32>
    %c0_22 = arith.constant 0 : index
    %c0_23 = arith.constant 0 : index
    %35 = vector.load %arg9[%c0_22, %c0_23] : memref<1x128xf32, #tpu.memory_space<vmem>>, vector<1x128xf32>
    tpu.vector_store %arg9[%c0_22, %c0_23], %34 {strides = array<i32>} : memref<1x128xf32, #tpu.memory_space<vmem>>, vector<1x128xf32>,
    %c80 = arith.constant 80 : index
    %c0_24 = arith.constant 0 : index
    %36 = vector.load %arg4[%c80, %c0_24] : memref<120x128xbf16, #tpu.memory_space<vmem>>, vector<32x128xbf16>
    %cst_25 = arith.constant dense<0.000000e+00> : vector<8x128xf32>
    %37 = tpu.matmul %8, %36, %cst_25 {dimension_numbers = #tpu.dot_dimension_numbers<[1], [0], [0], [1], [0, 0, 1, 1], [], []>} : vector<8x32xbf16>, vector<32x128xbf16>, vector<8x128xf32> -> vector<8x128xf32>
    %38 = vector.broadcast %5 : vector<1x128xf32> to vector<8x128xf32>
    %39 = arith.addf %37, %38 : vector<8x128xf32>
    %c0_26 = arith.constant 0 : index
    %c0_27 = arith.constant 0 : index
    %40 = vector.load %arg2[%c0_26, %c0_27] : memref<8x32xf32, #tpu.memory_space<vmem>>, vector<1x32xf32>
    %c1_28 = arith.constant 1 : index
    %c0_29 = arith.constant 0 : index
    %41 = vector.load %arg2[%c1_28, %c0_29] : memref<8x32xf32, #tpu.memory_space<vmem>>, vector<1x32xf32>
    %c2_30 = arith.constant 2 : index
    %c0_31 = arith.constant 0 : index
    %42 = vector.load %arg2[%c2_30, %c0_31] : memref<8x32xf32, #tpu.memory_space<vmem>>, vector<1x32xf32>
    %c3_32 = arith.constant 3 : index
    %c0_33 = arith.constant 0 : index
    %43 = vector.load %arg2[%c3_32, %c0_33] : memref<8x32xf32, #tpu.memory_space<vmem>>, vector<1x32xf32>
    %c4_34 = arith.constant 4 : index
    %c0_35 = arith.constant 0 : index
    %44 = vector.load %arg2[%c4_34, %c0_35] : memref<8x32xf32, #tpu.memory_space<vmem>>, vector<1x32xf32>
    %c5_36 = arith.constant 5 : index
    %c0_37 = arith.constant 0 : index
    %45 = vector.load %arg2[%c5_36, %c0_37] : memref<8x32xf32, #tpu.memory_space<vmem>>, vector<1x32xf32>
    %c0_38 = arith.constant 0 : index
    %c0_39 = arith.constant 0 : index
    %46 = vector.load %arg9[%c0_38, %c0_39] : memref<1x128xf32, #tpu.memory_space<vmem>>, vector<1x128xf32>
    %47 = arith.truncf %40 : vector<1x32xf32> to vector<1x32xbf16>
    %c32 = arith.constant 32 : index
    %c0_40 = arith.constant 0 : index
    %48 = vector.load %arg3[%c32, %c0_40] : memref<288x128xbf16, #tpu.memory_space<vmem>>, vector<32x128xbf16>
    %cst_41 = arith.constant dense<0.000000e+00> : vector<1x128xf32>
    %49 = tpu.matmul %47, %48, %cst_41 {dimension_numbers = #tpu.dot_dimension_numbers<[1], [0], [0], [1], [0, 0, 1, 1], [], []>} : vector<1x32xbf16>, vector<32x128xbf16>, vector<1x128xf32> -> vector<1x128xf32>
    %50 = arith.addf %46, %49 : vector<1x128xf32>
    %51 = math.tanh %50 : vector<1x128xf32>
    %52 = arith.negf %50 : vector<1x128xf32>
    %53 = math.exp %52 : vector<1x128xf32>
    %cst_42 = arith.constant 1.000000e+00 : f32
    %54 = vector.broadcast %cst_42 : f32 to vector<1x128xf32>
    %55 = arith.addf %54, %53 : vector<1x128xf32>
    %56 = arith.divf %54, %55 : vector<1x128xf32>
    %57 = arith.select %14, %51, %56 : vector<1x128xi1>, vector<1x128xf32>
    %58 = vector.extract_strided_slice %57 {offsets = [0, 0], sizes = [1, 32], strides = [1, 1]} : vector<1x128xf32> to vector<1x32xf32>
    %59 = vector.extract_strided_slice %57 {offsets = [0, 32], sizes = [1, 32], strides = [1, 1]} : vector<1x128xf32> to vector<1x32xf32>
    %60 = vector.extract_strided_slice %57 {offsets = [0, 64], sizes = [1, 32], strides = [1, 1]} : vector<1x128xf32> to vector<1x32xf32>
    %61 = vector.extract_strided_slice %57 {offsets = [0, 96], sizes = [1, 32], strides = [1, 1]} : vector<1x128xf32> to vector<1x32xf32>
    %62 = arith.mulf %59, %41 : vector<1x32xf32>
    %63 = arith.mulf %58, %60 : vector<1x32xf32>
    %64 = arith.addf %62, %63 : vector<1x32xf32>
    %65 = math.tanh %64 : vector<1x32xf32>
    %66 = arith.mulf %61, %65 : vector<1x32xf32>
    %67 = arith.truncf %66 : vector<1x32xf32> to vector<1x32xbf16>
    %c48 = arith.constant 48 : index
    %c0_43 = arith.constant 0 : index
    %68 = vector.load %arg4[%c48, %c0_43] : memref<120x128xbf16, #tpu.memory_space<vmem>>, vector<32x128xbf16>
    %cst_44 = arith.constant dense<0.000000e+00> : vector<1x128xf32>
    %69 = tpu.matmul %67, %68, %cst_44 {dimension_numbers = #tpu.dot_dimension_numbers<[1], [0], [0], [1], [0, 0, 1, 1], [], []>} : vector<1x32xbf16>, vector<32x128xbf16>, vector<1x128xf32> -> vector<1x128xf32>
    %70 = vector.broadcast %69 : vector<1x128xf32> to vector<8x128xf32>
    %71 = arith.addf %70, %39 : vector<8x128xf32>
    %72 = math.tanh %71 : vector<8x128xf32>
    %73 = arith.truncf %72 : vector<8x128xf32> to vector<8x128xbf16>
    %cst_45 = arith.constant dense<0.000000e+00> : vector<1x8xf32>
    %74 = tpu.matmul %7, %73, %cst_45 {dimension_numbers = #tpu.dot_dimension_numbers<[1], [1], [0], [0], [0, 0, 1, 0], [], []>} : vector<1x128xbf16>, vector<8x128xbf16>, vector<1x8xf32> -> vector<1x8xf32>
    %cst_46 = arith.constant dense<0xFF800000> : vector<1xf32>
    %75 = vector.multi_reduction <maximumf>, %74, %cst_46 [1] : vector<1x8xf32> to vector<1xf32>
    %76 = vector.shape_cast %75 : vector<1xf32> to vector<1x1xf32>
    %77 = vector.broadcast %76 : vector<1x1xf32> to vector<1x8xf32>
    %78 = arith.subf %74, %77 : vector<1x8xf32>
    %79 = math.exp %78 : vector<1x8xf32>
    %cst_47 = arith.constant dense<0.000000e+00> : vector<1xf32>
    %80 = vector.multi_reduction <add>, %79, %cst_47 [1] : vector<1x8xf32> to vector<1xf32>
    %81 = vector.shape_cast %80 : vector<1xf32> to vector<1x1xf32>
    %82 = tpu.reciprocal %81 {approx = true} : vector<1x1xf32> -> vector<1x1xf32>
    %83 = vector.broadcast %82 : vector<1x1xf32> to vector<1x8xf32>
    %84 = arith.mulf %79, %83 : vector<1x8xf32>
    %85 = tpu.concatenate %84, %15 in 1 : vector<1x8xf32>, vector<1x120xf32> -> vector<1x128xf32>
    %c0_48 = arith.constant 0 : index
    %c0_49 = arith.constant 0 : index
    %c0_50 = arith.constant 0 : index
    %86 = vector.load %arg7[%c0_48, %c0_49, %c0_50] : memref<1x1x128xf32, #tpu.memory_space<vmem>>, vector<1x1x128xf32>
    %87 = vector.shape_cast %86 : vector<1x1x128xf32> to vector<1x128xf32>
    %88 = vector.shape_cast %85 : vector<1x128xf32> to vector<1x1x128xf32>
    tpu.vector_store %arg7[%c0_48, %c0_49, %c0_50], %88 {strides = array<i32>} : memref<1x1x128xf32, #tpu.memory_space<vmem>>, vector<1x1x128xf32>,
    %89 = arith.truncf %84 : vector<1x8xf32> to vector<1x8xbf16>
    %cst_51 = arith.constant dense<0.000000e+00> : vector<1x32xf32>
    %90 = tpu.matmul %89, %8, %cst_51 {dimension_numbers = #tpu.dot_dimension_numbers<[1], [0], [0], [1], [0, 0, 1, 1], [], []>} : vector<1x8xbf16>, vector<8x32xbf16>, vector<1x32xf32> -> vector<1x32xf32>
    %91 = arith.truncf %90 : vector<1x32xf32> to vector<1x32xbf16>
    %c64 = arith.constant 64 : index
    %c0_52 = arith.constant 0 : index
    %92 = vector.load %arg3[%c64, %c0_52] : memref<288x128xbf16, #tpu.memory_space<vmem>>, vector<32x128xbf16>
    %cst_53 = arith.constant dense<0.000000e+00> : vector<1x128xf32>
    %93 = tpu.matmul %67, %92, %cst_53 {dimension_numbers = #tpu.dot_dimension_numbers<[1], [0], [0], [1], [0, 0, 1, 1], [], []>} : vector<1x32xbf16>, vector<32x128xbf16>, vector<1x128xf32> -> vector<1x128xf32>
    %c96 = arith.constant 96 : index
    %c0_54 = arith.constant 0 : index
    %94 = vector.load %arg3[%c96, %c0_54] : memref<288x128xbf16, #tpu.memory_space<vmem>>, vector<32x128xbf16>
    %cst_55 = arith.constant dense<0.000000e+00> : vector<1x128xf32>
    %95 = tpu.matmul %91, %94, %cst_55 {dimension_numbers = #tpu.dot_dimension_numbers<[1], [0], [0], [1], [0, 0, 1, 1], [], []>} : vector<1x32xbf16>, vector<32x128xbf16>, vector<1x128xf32> -> vector<1x128xf32>
    %96 = arith.addf %93, %95 : vector<1x128xf32>
    %97 = arith.truncf %42 : vector<1x32xf32> to vector<1x32xbf16>
    %c128 = arith.constant 128 : index
    %c0_56 = arith.constant 0 : index
    %98 = vector.load %arg3[%c128, %c0_56] : memref<288x128xbf16, #tpu.memory_space<vmem>>, vector<32x128xbf16>
    %cst_57 = arith.constant dense<0.000000e+00> : vector<1x128xf32>
    %99 = tpu.matmul %97, %98, %cst_57 {dimension_numbers = #tpu.dot_dimension_numbers<[1], [0], [0], [1], [0, 0, 1, 1], [], []>} : vector<1x32xbf16>, vector<32x128xbf16>, vector<1x128xf32> -> vector<1x128xf32>
    %100 = arith.addf %96, %99 : vector<1x128xf32>
    %101 = arith.addf %100, %1 : vector<1x128xf32>
    %102 = math.tanh %101 : vector<1x128xf32>
    %103 = arith.negf %101 : vector<1x128xf32>
    %104 = math.exp %103 : vector<1x128xf32>
    %cst_58 = arith.constant 1.000000e+00 : f32
    %105 = vector.broadcast %cst_58 : f32 to vector<1x128xf32>
    %106 = arith.addf %105, %104 : vector<1x128xf32>
    %107 = arith.divf %105, %106 : vector<1x128xf32>
    %108 = arith.select %14, %102, %107 : vector<1x128xi1>, vector<1x128xf32>
    %109 = vector.extract_strided_slice %108 {offsets = [0, 0], sizes = [1, 32], strides = [1, 1]} : vector<1x128xf32> to vector<1x32xf32>
    %110 = vector.extract_strided_slice %108 {offsets = [0, 32], sizes = [1, 32], strides = [1, 1]} : vector<1x128xf32> to vector<1x32xf32>
    %111 = vector.extract_strided_slice %108 {offsets = [0, 64], sizes = [1, 32], strides = [1, 1]} : vector<1x128xf32> to vector<1x32xf32>
    %112 = vector.extract_strided_slice %108 {offsets = [0, 96], sizes = [1, 32], strides = [1, 1]} : vector<1x128xf32> to vector<1x32xf32>
    %113 = arith.mulf %110, %43 : vector<1x32xf32>
    %114 = arith.mulf %109, %111 : vector<1x32xf32>
    %115 = arith.addf %113, %114 : vector<1x32xf32>
    %116 = math.tanh %115 : vector<1x32xf32>
    %117 = arith.mulf %112, %116 : vector<1x32xf32>
    %118 = arith.addf %117, %66 : vector<1x32xf32>
    %119 = arith.truncf %118 : vector<1x32xf32> to vector<1x32xbf16>
    %c160 = arith.constant 160 : index
    %c0_59 = arith.constant 0 : index
    %120 = vector.load %arg3[%c160, %c0_59] : memref<288x128xbf16, #tpu.memory_space<vmem>>, vector<32x128xbf16>
    %cst_60 = arith.constant dense<0.000000e+00> : vector<1x128xf32>
    %121 = tpu.matmul %119, %120, %cst_60 {dimension_numbers = #tpu.dot_dimension_numbers<[1], [0], [0], [1], [0, 0, 1, 1], [], []>} : vector<1x32xbf16>, vector<32x128xbf16>, vector<1x128xf32> -> vector<1x128xf32>
    %122 = arith.addf %90, %90 : vector<1x32xf32>
    %123 = arith.truncf %122 : vector<1x32xf32> to vector<1x32xbf16>
    %c192 = arith.constant 192 : index
    %c0_61 = arith.constant 0 : index
    %124 = vector.load %arg3[%c192, %c0_61] : memref<288x128xbf16, #tpu.memory_space<vmem>>, vector<32x128xbf16>
    %cst_62 = arith.constant dense<0.000000e+00> : vector<1x128xf32>
    %125 = tpu.matmul %123, %124, %cst_62 {dimension_numbers = #tpu.dot_dimension_numbers<[1], [0], [0], [1], [0, 0, 1, 1], [], []>} : vector<1x32xbf16>, vector<32x128xbf16>, vector<1x128xf32> -> vector<1x128xf32>
    %126 = arith.addf %121, %125 : vector<1x128xf32>
    %127 = arith.truncf %44 : vector<1x32xf32> to vector<1x32xbf16>
    %c224 = arith.constant 224 : index
    %c0_63 = arith.constant 0 : index
    %128 = vector.load %arg3[%c224, %c0_63] : memref<288x128xbf16, #tpu.memory_space<vmem>>, vector<32x128xbf16>
    %cst_64 = arith.constant dense<0.000000e+00> : vector<1x128xf32>
    %129 = tpu.matmul %127, %128, %cst_64 {dimension_numbers = #tpu.dot_dimension_numbers<[1], [0], [0], [1], [0, 0, 1, 1], [], []>} : vector<1x32xbf16>, vector<32x128xbf16>, vector<1x128xf32> -> vector<1x128xf32>
    %130 = arith.addf %126, %129 : vector<1x128xf32>
    %131 = arith.addf %130, %2 : vector<1x128xf32>
    %132 = math.tanh %131 : vector<1x128xf32>
    %133 = arith.negf %131 : vector<1x128xf32>
    %134 = math.exp %133 : vector<1x128xf32>
    %cst_65 = arith.constant 1.000000e+00 : f32
    %135 = vector.broadcast %cst_65 : f32 to vector<1x128xf32>
    %136 = arith.addf %135, %134 : vector<1x128xf32>
    %137 = arith.divf %135, %136 : vector<1x128xf32>
    %138 = arith.select %14, %132, %137 : vector<1x128xi1>, vector<1x128xf32>
    %139 = vector.extract_strided_slice %138 {offsets = [0, 0], sizes = [1, 32], strides = [1, 1]} : vector<1x128xf32> to vector<1x32xf32>
    %140 = vector.extract_strided_slice %138 {offsets = [0, 32], sizes = [1, 32], strides = [1, 1]} : vector<1x128xf32> to vector<1x32xf32>
    %141 = vector.extract_strided_slice %138 {offsets = [0, 64], sizes = [1, 32], strides = [1, 1]} : vector<1x128xf32> to vector<1x32xf32>
    %142 = vector.extract_strided_slice %138 {offsets = [0, 96], sizes = [1, 32], strides = [1, 1]} : vector<1x128xf32> to vector<1x32xf32>
    %143 = arith.mulf %140, %45 : vector<1x32xf32>
    %144 = arith.mulf %139, %141 : vector<1x32xf32>
    %145 = arith.addf %143, %144 : vector<1x32xf32>
    %146 = math.tanh %145 : vector<1x32xf32>
    %147 = arith.mulf %142, %146 : vector<1x32xf32>
    %148 = arith.truncf %147 : vector<1x32xf32> to vector<1x32xbf16>
    %c256 = arith.constant 256 : index
    %c0_66 = arith.constant 0 : index
    %149 = vector.load %arg3[%c256, %c0_66] : memref<288x128xbf16, #tpu.memory_space<vmem>>, vector<32x128xbf16>
    %cst_67 = arith.constant dense<0.000000e+00> : vector<1x128xf32>
    %150 = tpu.matmul %148, %149, %cst_67 {dimension_numbers = #tpu.dot_dimension_numbers<[1], [0], [0], [1], [0, 0, 1, 1], [], []>} : vector<1x32xbf16>, vector<32x128xbf16>, vector<1x128xf32> -> vector<1x128xf32>
    %151 = arith.addf %150, %6 : vector<1x128xf32>
    %c0_68 = arith.constant 0 : index
    %c0_69 = arith.constant 0 : index
    %c0_70 = arith.constant 0 : index
    %152 = vector.load %arg6[%c0_68, %c0_69, %c0_70] : memref<1x1x128xf32, #tpu.memory_space<vmem>>, vector<1x1x128xf32>
    %153 = vector.shape_cast %152 : vector<1x1x128xf32> to vector<1x128xf32>
    %154 = vector.shape_cast %151 : vector<1x128xf32> to vector<1x1x128xf32>
    tpu.vector_store %arg6[%c0_68, %c0_69, %c0_70], %154 {strides = array<i32>} : memref<1x1x128xf32, #tpu.memory_space<vmem>>, vector<1x1x128xf32>,
    %cst_71 = arith.constant 0.000000e+00 : f32
    %155 = vector.broadcast %cst_71 : f32 to vector<2x32xf32>
    %156 = tpu.concatenate %66, %64, %117, %115, %147, %145, %155 in 0 : vector<1x32xf32>, vector<1x32xf32>, vector<1x32xf32>, vector<1x32xf32>, vector<1x32xf32>, vector<1x32xf32>, vector<2x32xf32> -> vector<8x32xf32>
    %c0_72 = arith.constant 0 : index
    %c0_73 = arith.constant 0 : index
    %157 = vector.load %arg8[%c0_72, %c0_73] : memref<8x32xf32, #tpu.memory_space<vmem>>, vector<8x32xf32>
    tpu.vector_store %arg8[%c0_72, %c0_73], %156 {strides = array<i32>} : memref<8x32xf32, #tpu.memory_space<vmem>>, vector<8x32xf32>,
    return
  }
}

</mosaic_0001>

<llo_original>
// kernel: tpu_custom_call.1
$region0: #{tpu_custom_call.1}
  #allocation0 [shape = 'u32[]', space=smem, size = 0x4, offset = 0x4, fixed_abs, tag = 'smem constant byte address 0x4 - core index']
  #allocation1 [shape = 'u32[144,128]{1,0:T(1,128)}', space=vmem, size = 0x12000, scoped, tag = 'internal scratch']
  #allocation2 [shape = 'f32[1,128]{1,0:T(1,128)}', space=vmem, size = 0x200, scoped, tag = 'scratch operand']
  %s0 = inlined_call_operand.hbm [shape: f32[1,16], index: 0, kind: input, shape index: {}]
  %s1 = inlined_call_operand.hbm [shape: bf16[8,32], index: 1, kind: input, shape index: {}]
  %s2 = inlined_call_operand.hbm [shape: f32[8,32], index: 2, kind: input, shape index: {}]
  %s3 = inlined_call_operand.hbm [shape: bf16[288,128], index: 3, kind: input, shape index: {}]
  %s4 = inlined_call_operand.hbm [shape: bf16[120,128], index: 4, kind: input, shape index: {}]
  %s5 = inlined_call_operand.vmem [shape: f32[8,128], index: 5, kind: input, shape index: {}]
  %s6 = inlined_call_operand.hbm [shape: f32[1,1,128], index: 6, kind: output, shape index: {0}]
  %s7 = inlined_call_operand.hbm [shape: f32[1,1,128], index: 7, kind: output, shape index: {1}]
  %s8 = inlined_call_operand.hbm [shape: f32[8,32], index: 8, kind: output, shape index: {2}]
  %9 = xla_tuple %s6, %s7, %s8
  %s10 = sld [smem:[#allocation0]]
  $region70: #{tpu_custom_call.1} parent=0
    _
  %s12 = ssub.s32 1, %s10
  %s13 = scalar_select 0, %s12, %s10
  $region1: #{tpu_custom_call.1} parent=0
    #allocation3 [shape = 'u8[512]{0}', space=vmem, size = 0x400, scoped, tag = 'input window, operand 0, single buffered']
    #allocation4 [shape = 's32[1]{0}', space=sflag, size = 0x4, scoped, tag = 'scoped memory for tpu_custom_call.1']
    #allocation5 [shape = 's32[1]{0}', space=sflag, size = 0x4, scoped, tag = 'scoped memory for tpu_custom_call.1']
    #allocation6 [shape = 'u8[2048]{0}', space=vmem, size = 0x800, scoped, tag = 'input window, operand 1, single buffered']
    #allocation7 [shape = 's32[1]{0}', space=sflag, size = 0x4, scoped, tag = 'scoped memory for tpu_custom_call.1']
    #allocation8 [shape = 'u8[4096]{0}', space=vmem, size = 0x1000, scoped, tag = 'input window, operand 2, single buffered']
    #allocation9 [shape = 'u8[73728]{0}', space=vmem, size = 0x12000, scoped, tag = 'input window, operand 3, single buffered']
    #allocation10 [shape = 's32[1]{0}', space=sflag, size = 0x4, scoped, tag = 'scoped memory for tpu_custom_call.1']
    #allocation11 [shape = 'u8[30720]{0}', space=vmem, size = 0x7800, scoped, tag = 'input window, operand 4, single buffered']
    #allocation12 [shape = 'u8[512]{0}', space=vmem, size = 0x400, scoped, tag = 'output window, operand 0, single buffered']
    #allocation13 [shape = 'u8[512]{0}', space=vmem, size = 0x400, scoped, tag = 'output window, operand 1, single buffered']
    #allocation14 [shape = 's32[1]{0}', space=sflag, size = 0x4, scoped, tag = 'scoped memory for tpu_custom_call.1']
    #allocation15 [shape = 'u8[4096]{0}', space=vmem, size = 0x1000, scoped, tag = 'output window, operand 2, single buffered']
    %14 = vsyncpa [#allocation4], 0
    %15 = vsyncpa [#allocation7], 0
    %16 = vsyncpa [#allocation10], 0
    %17 = vsyncpa [#allocation5], 0
    %18 = vsyncpa [#allocation14], 0
    // Predicated region
    $region2: #{tpu_custom_call.1} parent=1 // pred_check
      _
    $region3: #{tpu_custom_call.1} parent=1 // pred_check_branch
      %20 = sbr.rel (0) target = $region5
    $region4: #{tpu_custom_call.1} parent=1 // pred_region
      %s22 = ssub.s32 16, 16
      %23 = vsyncadd [#allocation4], %s22
      %s25 = sshll.u32 [#allocation3], 4
      %s26 = int_to_ptr.vmem [resolvable:$true] %s25
      %28 = dma.hbm_to_vmem [thread:$0]  %s0, 16, %s26, [#allocation4]
    $region5: #{tpu_custom_call.1} parent=1 // pred_fallthru
      _
    // Predicated region
    $region6: #{tpu_custom_call.1} parent=1 // pred_check
      _
    $region7: #{tpu_custom_call.1} parent=1 // pred_check_branch
      %30 = sbr.rel (0) target = $region9
    $region8: #{tpu_custom_call.1} parent=1 // pred_region
      %s32 = ssub.s32 64, 64
      %33 = vsyncadd [#allocation7], %s32
      %s35 = sshll.u32 [#allocation6], 4
      %s36 = int_to_ptr.vmem [resolvable:$true] %s35
      %38 = dma.hbm_to_vmem [thread:$0]  %s1, 64, %s36, [#allocation7]
    $region9: #{tpu_custom_call.1} parent=1 // pred_fallthru
      _
    // Predicated region
    $region10: #{tpu_custom_call.1} parent=1 // pred_check
      _
    $region11: #{tpu_custom_call.1} parent=1 // pred_check_branch
      %40 = sbr.rel (0) target = $region13
    $region12: #{tpu_custom_call.1} parent=1 // pred_region
      %s42 = ssub.s32 128, 128
      %43 = vsyncadd [#allocation7], %s42
      %s45 = sshll.u32 [#allocation8], 4
      %s46 = int_to_ptr.vmem [resolvable:$true] %s45
      %48 = dma.hbm_to_vmem [thread:$0]  %s2, 128, %s46, [#allocation7]
    $region13: #{tpu_custom_call.1} parent=1 // pred_fallthru
      _
    // Predicated region
    $region14: #{tpu_custom_call.1} parent=1 // pred_check
      _
    $region15: #{tpu_custom_call.1} parent=1 // pred_check_branch
      %50 = sbr.rel (0) target = $region17
    $region16: #{tpu_custom_call.1} parent=1 // pred_region
      %s52 = ssub.s32 2304, 2304
      %53 = vsyncadd [#allocation10], %s52
      %s54 = sshll.u32 [#allocation9], 4
      %s55 = int_to_ptr.vmem [resolvable:$true] %s54
      %60 = dma.hbm_to_vmem [thread:$0]  %s3, 2304, %s55, [#allocation10], 64, 64, 4
    $region17: #{tpu_custom_call.1} parent=1 // pred_fallthru
      _
    // Predicated region
    $region18: #{tpu_custom_call.1} parent=1 // pred_check
      _
    $region19: #{tpu_custom_call.1} parent=1 // pred_check_branch
      %62 = sbr.rel (0) target = $region21
    $region20: #{tpu_custom_call.1} parent=1 // pred_region
      %s64 = ssub.s32 960, 960
      %65 = vsyncadd [#allocation10], %s64
      %s66 = sshll.u32 [#allocation11], 4
      %s67 = int_to_ptr.vmem [resolvable:$true] %s66
      %72 = dma.hbm_to_vmem [thread:$0]  %s4, 960, %s67, [#allocation10], 64, 64, 4
    $region21: #{tpu_custom_call.1} parent=1 // pred_fallthru
      _
    // Predicated region
    $region22: #{tpu_custom_call.1} parent=1 // pred_check
      _
    $region23: #{tpu_custom_call.1} parent=1 // pred_check_branch
      %74 = sbr.rel (0) target = $region25
    $region24: #{tpu_custom_call.1} parent=1 // pred_region
      _
    $region25: #{tpu_custom_call.1} parent=1 // pred_fallthru
      _
    // Predicated region
    $region26: #{tpu_custom_call.1} parent=1 // pred_check
      _
    $region27: #{tpu_custom_call.1} parent=1 // pred_check_branch
      %76 = sbr.rel (0) target = $region29
    $region28: #{tpu_custom_call.1} parent=1 // pred_region
      %77 = dma.done [#allocation4], 16
    $region29: #{tpu_custom_call.1} parent=1 // pred_fallthru
      _
    // Predicated region
    $region30: #{tpu_custom_call.1} parent=1 // pred_check
      _
    $region31: #{tpu_custom_call.1} parent=1 // pred_check_branch
      %79 = sbr.rel (0) target = $region33
    $region32: #{tpu_custom_call.1} parent=1 // pred_region
      %80 = dma.done [#allocation7], 64
    $region33: #{tpu_custom_call.1} parent=1 // pred_fallthru
      _
    // Predicated region
    $region34: #{tpu_custom_call.1} parent=1 // pred_check
      _
    $region35: #{tpu_custom_call.1} parent=1 // pred_check_branch
      %82 = sbr.rel (0) target = $region37
    $region36: #{tpu_custom_call.1} parent=1 // pred_region
      %83 = dma.done [#allocation7], 128
    $region37: #{tpu_custom_call.1} parent=1 // pred_fallthru
      _
    // Predicated region
    $region38: #{tpu_custom_call.1} parent=1 // pred_check
      _
    $region39: #{tpu_custom_call.1} parent=1 // pred_check_branch
      %85 = sbr.rel (0) target = $region41
    $region40: #{tpu_custom_call.1} parent=1 // pred_region
      %86 = dma.done [#allocation10], 2304
    $region41: #{tpu_custom_call.1} parent=1 // pred_fallthru
      _
    // Predicated region
    $region42: #{tpu_custom_call.1} parent=1 // pred_check
      _
    $region43: #{tpu_custom_call.1} parent=1 // pred_check_branch
      %88 = sbr.rel (0) target = $region45
    $region44: #{tpu_custom_call.1} parent=1 // pred_region
      %89 = dma.done [#allocation10], 960
    $region45: #{tpu_custom_call.1} parent=1 // pred_fallthru
      _
    %v91 = vld [vmem:[%s5] sm:$0x1]
    %v92 = vld [vmem:[%s5 + $0x1] sm:$0x1]
    %v93 = vld [vmem:[%s5 + $0x2] sm:$0x1]
    %v94 = vld [vmem:[%s5 + $0x3] sm:$0x1]
    %v95 = vld [vmem:[%s5 + $0x4] sm:$0x1]
    %v96 = vld [vmem:[%s5 + $0x5] sm:$0x1]
    %v97 = vld [vmem:[%s5 + $0x6] sm:$0x1]
    %v98 = vld [vmem:[#allocation11 + $0x38] sm:$0x1]
    %v99 = vld [vmem:[#allocation6] sm:$0xf]
    %v100 = vlaneseq
    %v101 = vand.u32 %v100, 127
    %vm102 = vcmp.ge.s32.totalorder %v101, 64
    %vm103 = vcmp.lt.s32.totalorder %v101, 96
    %vm104 = vmand %vm102, %vm103
    %v105 = vld [vmem:[#allocation3] sm:$0x1]
    %v106 = vpack.c.bf16 %v105, %v105
    %v107 = vld [vmem:[#allocation11] sm:$0xf]
    %v108 = vld [vmem:[#allocation11 + $0x4] sm:$0xf]
    %v111 = vunpack.c.l.b16 %v107
    %v112 = vunpack.c.l.b16 %v108
    %v113 = vpack.c.b16 %v112, %v111
    %vm115 = vcmask 130048
    %v117 = vsel %vm115, %v106, 0
    %119 = vmatprep.subr.bf16.mxu0 0
    %120 = vmatpush1.bf16.msra.mxu0 %v113
    %121 = vmatprep.subr.bf16.mxu0 0
    %122 = vmatpush1.bf16.msra.mxu0 0
    %123 = vmatprep.subr.bf16.mxu0 0
    %124 = vmatpush1.bf16.msra.mxu0 0
    %125 = vmatprep.subr.bf16.mxu0 0
    %126 = vmatpush1.bf16.msra.mxu0 0
    %127 = vmatprep.subr.bf16.mxu0 0
    %128 = vmatpush1.bf16.msra.mxu0 0
    %129 = vmatprep.subr.bf16.mxu0 0
    %130 = vmatpush1.bf16.msra.mxu0 0
    %131 = vmatprep.subr.bf16.mxu0 0
    %132 = vmatpush1.bf16.msra.mxu0 0
    %133 = vmatprep.subr.bf16.mxu0 0
    %134 = vmatpush1.bf16.msra.mxu0 0
    %135 = vmatprep.subr.bf16.mxu0 0
    %136 = vmatpush1.bf16.msra.mxu0 0
    %137 = vmatprep.subr.bf16.mxu0 0
    %138 = vmatpush1.bf16.msra.mxu0 0
    %139 = vmatprep.subr.bf16.mxu0 0
    %140 = vmatpush1.bf16.msra.mxu0 0
    %141 = vmatprep.subr.bf16.mxu0 0
    %142 = vmatpush1.bf16.msra.mxu0 0
    %143 = vmatprep.subr.bf16.mxu0 0
    %144 = vmatpush1.bf16.msra.mxu0 0
    %145 = vmatprep.subr.bf16.mxu0 0
    %146 = vmatpush1.bf16.msra.mxu0 0
    %147 = vmatprep.subr.bf16.mxu0 0
    %148 = vmatpush1.bf16.msra.mxu0 0
    %149 = vmatprep.subr.bf16.mxu0 0
    %150 = vmatpush1.bf16.msra.mxu0 0
    %151 = vmatprep.mubr.bf16.mxu0 0
    %152 = vmatmul.mubr.bf16.gmra.mrb[0].mxu0 %v117
    %v153 = vpop.f32.mrb[0].mxu0
    %v154 = vadd.f32 %v94, %v153
    %v155 = vpop.f32.mrb[0].mxu0
    %v156 = vpop.f32.mrb[0].mxu0
    %v157 = vpop.f32.mrb[0].mxu0
    %158 = vdwg.mxu0
    %v159 = vmax.f32 %v154, 0.0
    %v160 = vpack.c.bf16 %v159, %v159
    %v161 = vld [vmem:[#allocation11 + $0x8] sm:$0xf]
    %v162 = vld [vmem:[#allocation11 + $0xc] sm:$0xf]
    %v163 = vld [vmem:[#allocation11 + $0x10] sm:$0xf]
    %v164 = vld [vmem:[#allocation11 + $0x14] sm:$0xf]
    %v169 = vunpack.c.l.b16 %v161
    %v170 = vunpack.c.l.b16 %v162
    %v171 = vunpack.c.l.b16 %v163
    %v172 = vunpack.c.l.b16 %v164
    %v173 = vpack.c.b16 %v170, %v169
    %v174 = vpack.c.b16 %v172, %v171
    %vm177 = vcmask 261120
    %v179 = vsel %vm177, %v160, 0
    %181 = vmatprep.subr.bf16.mxu0 0
    %182 = vmatpush1.bf16.msra.mxu0 %v173
    %183 = vmatprep.subr.bf16.mxu0 0
    %184 = vmatpush1.bf16.msra.mxu0 %v174
    %185 = vmatprep.subr.bf16.mxu0 0
    %186 = vmatpush1.bf16.msra.mxu0 0
    %187 = vmatprep.subr.bf16.mxu0 0
    %188 = vmatpush1.bf16.msra.mxu0 0
    %189 = vmatprep.subr.bf16.mxu0 0
    %190 = vmatpush1.bf16.msra.mxu0 0
    %191 = vmatprep.subr.bf16.mxu0 0
    %192 = vmatpush1.bf16.msra.mxu0 0
    %193 = vmatprep.subr.bf16.mxu0 0
    %194 = vmatpush1.bf16.msra.mxu0 0
    %195 = vmatprep.subr.bf16.mxu0 0
    %196 = vmatpush1.bf16.msra.mxu0 0
    %197 = vmatprep.subr.bf16.mxu0 0
    %198 = vmatpush1.bf16.msra.mxu0 0
    %199 = vmatprep.subr.bf16.mxu0 0
    %200 = vmatpush1.bf16.msra.mxu0 0
    %201 = vmatprep.subr.bf16.mxu0 0
    %202 = vmatpush1.bf16.msra.mxu0 0
    %203 = vmatprep.subr.bf16.mxu0 0
    %204 = vmatpush1.bf16.msra.mxu0 0
    %205 = vmatprep.subr.bf16.mxu0 0
    %206 = vmatpush1.bf16.msra.mxu0 0
    %207 = vmatprep.subr.bf16.mxu0 0
    %208 = vmatpush1.bf16.msra.mxu0 0
    %209 = vmatprep.subr.bf16.mxu0 0
    %210 = vmatpush1.bf16.msra.mxu0 0
    %211 = vmatprep.subr.bf16.mxu0 0
    %212 = vmatpush1.bf16.msra.mxu0 0
    %213 = vmatprep.mubr.bf16.mxu0 0
    %214 = vmatmul.mubr.bf16.gmra.mrb[0].mxu0 %v179
    %v215 = vpop.f32.mrb[0].mxu0
    %v216 = vadd.f32 %v95, %v215
    %v217 = vpop.f32.mrb[0].mxu0
    %v218 = vpop.f32.mrb[0].mxu0
    %v219 = vpop.f32.mrb[0].mxu0
    %220 = vdwg.mxu0
    %v221 = vmax.f32 %v216, 0.0
    %v222 = vpack.c.bf16 %v221, %v221
    %v223 = vld [vmem:[#allocation9] sm:$0xf]
    %v224 = vld [vmem:[#allocation9 + $0x4] sm:$0xf]
    %v225 = vld [vmem:[#allocation9 + $0x8] sm:$0xf]
    %v226 = vld [vmem:[#allocation9 + $0xc] sm:$0xf]
    %v231 = vunpack.c.l.b16 %v223
    %v232 = vunpack.c.l.b16 %v224
    %v233 = vunpack.c.l.b16 %v225
    %v234 = vunpack.c.l.b16 %v226
    %v235 = vpack.c.b16 %v232, %v231
    %v236 = vpack.c.b16 %v234, %v233
    %v240 = vsel %vm177, %v222, 0
    %242 = vmatprep.subr.bf16.mxu0 0
    %243 = vmatpush1.bf16.msra.mxu0 %v235
    %244 = vmatprep.subr.bf16.mxu0 0
    %245 = vmatpush1.bf16.msra.mxu0 %v236
    %246 = vmatprep.subr.bf16.mxu0 0
    %247 = vmatpush1.bf16.msra.mxu0 0
    %248 = vmatprep.subr.bf16.mxu0 0
    %249 = vmatpush1.bf16.msra.mxu0 0
    %250 = vmatprep.subr.bf16.mxu0 0
    %251 = vmatpush1.bf16.msra.mxu0 0
    %252 = vmatprep.subr.bf16.mxu0 0
    %253 = vmatpush1.bf16.msra.mxu0 0
    %254 = vmatprep.subr.bf16.mxu0 0
    %255 = vmatpush1.bf16.msra.mxu0 0
    %256 = vmatprep.subr.bf16.mxu0 0
    %257 = vmatpush1.bf16.msra.mxu0 0
    %258 = vmatprep.subr.bf16.mxu0 0
    %259 = vmatpush1.bf16.msra.mxu0 0
    %260 = vmatprep.subr.bf16.mxu0 0
    %261 = vmatpush1.bf16.msra.mxu0 0
    %262 = vmatprep.subr.bf16.mxu0 0
    %263 = vmatpush1.bf16.msra.mxu0 0
    %264 = vmatprep.subr.bf16.mxu0 0
    %265 = vmatpush1.bf16.msra.mxu0 0
    %266 = vmatprep.subr.bf16.mxu0 0
    %267 = vmatpush1.bf16.msra.mxu0 0
    %268 = vmatprep.subr.bf16.mxu0 0
    %269 = vmatpush1.bf16.msra.mxu0 0
    %270 = vmatprep.subr.bf16.mxu0 0
    %271 = vmatpush1.bf16.msra.mxu0 0
    %272 = vmatprep.subr.bf16.mxu0 0
    %273 = vmatpush1.bf16.msra.mxu0 0
    %274 = vmatprep.mubr.bf16.mxu0 0
    %275 = vmatmul.mubr.bf16.gmra.mrb[0].mxu0 %v240
    %v276 = vpop.f32.mrb[0].mxu0
    %v277 = vadd.f32 %v91, %v276
    %v278 = vpop.f32.mrb[0].mxu0
    %v279 = vpop.f32.mrb[0].mxu0
    %v280 = vpop.f32.mrb[0].mxu0
    %281 = vdwg.mxu0
    %282 = vst [vmem:[#allocation2] sm:$0x1] %v277
    %v283 = vld [vmem:[#allocation11 + $0x28] sm:$0xf]
    %v284 = vld [vmem:[#allocation11 + $0x2c] sm:$0xf]
    %v285 = vld [vmem:[#allocation11 + $0x30] sm:$0xf]
    %v286 = vld [vmem:[#allocation11 + $0x34] sm:$0xf]
    %v287 = vlaneseq
    %v288 = vshrl.u32 %v287, 7
    %v289 = vsub.s32 0, %v288
    %v290 = vrot.slane %v96, %v289
    %v295 = vunpack.c.l.b16 %v283
    %v296 = vunpack.c.l.b16 %v284
    %v297 = vunpack.c.l.b16 %v285
    %v298 = vunpack.c.l.b16 %v286
    %v299 = vpack.c.b16 %v296, %v295
    %v300 = vpack.c.b16 %v298, %v297
    %v304 = vsel %vm177, %v99, 0
    %306 = vmatprep.subr.bf16.mxu0 0
    %307 = vmatpush1.bf16.msra.mxu0 %v299
    %308 = vmatprep.subr.bf16.mxu0 0
    %309 = vmatpush1.bf16.msra.mxu0 %v300
    %310 = vmatprep.subr.bf16.mxu0 0
    %311 = vmatpush1.bf16.msra.mxu0 0
    %312 = vmatprep.subr.bf16.mxu0 0
    %313 = vmatpush1.bf16.msra.mxu0 0
    %314 = vmatprep.subr.bf16.mxu0 0
    %315 = vmatpush1.bf16.msra.mxu0 0
    %316 = vmatprep.subr.bf16.mxu0 0
    %317 = vmatpush1.bf16.msra.mxu0 0
    %318 = vmatprep.subr.bf16.mxu0 0
    %319 = vmatpush1.bf16.msra.mxu0 0
    %320 = vmatprep.subr.bf16.mxu0 0
    %321 = vmatpush1.bf16.msra.mxu0 0
    %322 = vmatprep.subr.bf16.mxu0 0
    %323 = vmatpush1.bf16.msra.mxu0 0
    %324 = vmatprep.subr.bf16.mxu0 0
    %325 = vmatpush1.bf16.msra.mxu0 0
    %326 = vmatprep.subr.bf16.mxu0 0
    %327 = vmatpush1.bf16.msra.mxu0 0
    %328 = vmatprep.subr.bf16.mxu0 0
    %329 = vmatpush1.bf16.msra.mxu0 0
    %330 = vmatprep.subr.bf16.mxu0 0
    %331 = vmatpush1.bf16.msra.mxu0 0
    %332 = vmatprep.subr.bf16.mxu0 0
    %333 = vmatpush1.bf16.msra.mxu0 0
    %334 = vmatprep.subr.bf16.mxu0 0
    %335 = vmatpush1.bf16.msra.mxu0 0
    %336 = vmatprep.subr.bf16.mxu0 0
    %337 = vmatpush1.bf16.msra.mxu0 0
    %338 = vmatprep.mubr.bf16.mxu0 0
    %339 = vmatmul.mubr.bf16.gmra.mrb[0].mxu0 %v304
    %v340 = vpop.f32.mrb[0].mxu0
    %v341 = vadd.f32 %v290, %v340
    %v342 = vpop.f32.mrb[0].mxu0
    %v343 = vpop.f32.mrb[0].mxu0
    %v344 = vpop.f32.mrb[0].mxu0
    %345 = vdwg.mxu0
    %v346 = vld [vmem:[#allocation8] sm:$0x1]
    %v347 = vld [vmem:[#allocation8 + $0x1] sm:$0x1]
    %v348 = vld [vmem:[#allocation8 + $0x2] sm:$0x1]
    %v349 = vld [vmem:[#allocation8 + $0x3] sm:$0x1]
    %v350 = vld [vmem:[#allocation8 + $0x4] sm:$0x1]
    %v351 = vld [vmem:[#allocation8 + $0x5] sm:$0x1]
    %v352 = vld [vmem:[#allocation2] sm:$0x1]
    %v353 = vpack.c.bf16 %v346, %v346
    %v354 = vld [vmem:[#allocation9 + $0x10] sm:$0xf]
    %v355 = vld [vmem:[#allocation9 + $0x14] sm:$0xf]
    %v356 = vld [vmem:[#allocation9 + $0x18] sm:$0xf]
    %v357 = vld [vmem:[#allocation9 + $0x1c] sm:$0xf]
    %v362 = vunpack.c.l.b16 %v354
    %v363 = vunpack.c.l.b16 %v355
    %v364 = vunpack.c.l.b16 %v356
    %v365 = vunpack.c.l.b16 %v357
    %v366 = vpack.c.b16 %v363, %v362
    %v367 = vpack.c.b16 %v365, %v364
    %v371 = vsel %vm177, %v353, 0
    %373 = vmatprep.subr.bf16.mxu0 0
    %374 = vmatpush1.bf16.msra.mxu0 %v366
    %375 = vmatprep.subr.bf16.mxu0 0
    %376 = vmatpush1.bf16.msra.mxu0 %v367
    %377 = vmatprep.subr.bf16.mxu0 0
    %378 = vmatpush1.bf16.msra.mxu0 0
    %379 = vmatprep.subr.bf16.mxu0 0
    %380 = vmatpush1.bf16.msra.mxu0 0
    %381 = vmatprep.subr.bf16.mxu0 0
    %382 = vmatpush1.bf16.msra.mxu0 0
    %383 = vmatprep.subr.bf16.mxu0 0
    %384 = vmatpush1.bf16.msra.mxu0 0
    %385 = vmatprep.subr.bf16.mxu0 0
    %386 = vmatpush1.bf16.msra.mxu0 0
    %387 = vmatprep.subr.bf16.mxu0 0
    %388 = vmatpush1.bf16.msra.mxu0 0
    %389 = vmatprep.subr.bf16.mxu0 0
    %390 = vmatpush1.bf16.msra.mxu0 0
    %391 = vmatprep.subr.bf16.mxu0 0
    %392 = vmatpush1.bf16.msra.mxu0 0
    %393 = vmatprep.subr.bf16.mxu0 0
    %394 = vmatpush1.bf16.msra.mxu0 0
    %395 = vmatprep.subr.bf16.mxu0 0
    %396 = vmatpush1.bf16.msra.mxu0 0
    %397 = vmatprep.subr.bf16.mxu0 0
    %398 = vmatpush1.bf16.msra.mxu0 0
    %399 = vmatprep.subr.bf16.mxu0 0
    %400 = vmatpush1.bf16.msra.mxu0 0
    %401 = vmatprep.subr.bf16.mxu0 0
    %402 = vmatpush1.bf16.msra.mxu0 0
    %403 = vmatprep.subr.bf16.mxu0 0
    %404 = vmatpush1.bf16.msra.mxu0 0
    %405 = vmatprep.mubr.bf16.mxu0 0
    %406 = vmatmul.mubr.bf16.gmra.mrb[0].mxu0 %v371
    %v407 = vpop.f32.mrb[0].mxu0
    %v408 = vadd.f32 0.0, %v407
    %v409 = vpop.f32.mrb[0].mxu0
    %v410 = vpop.f32.mrb[0].mxu0
    %v411 = vpop.f32.mrb[0].mxu0
    %412 = vdwg.mxu0
    %v413 = vadd.f32 %v352, %v408
    %v414 = vtanh.pop %v413
    %v415 = vxor.u32 %v413, 2147483648
    %v416 = vmul.f32 %v415, 1.442695
    %v417 = vpow.pop %v416
    %v418 = vadd.f32 %v417, 1.0
    %v419 = vrcp.pop %v418
    %v420 = vmul.f32 1.0, %v419
    %v421 = vsel %vm104, %v414, %v420
    %423 = vrot.lane.b32.xlu0 %v347, 32
    %v424 = vpop.permute.xlu0 %423
    %v426 = vmul.f32 %v421, %v424
    %428 = vrot.lane.b32.xlu0 %v421, 64
    %v429 = vpop.permute.xlu0 %428
    %v431 = vmul.f32 %v421, %v429
    %433 = vrot.lane.b32.xlu0 %v431, 32
    %v434 = vpop.permute.xlu0 %433
    %v436 = vadd.f32 %v426, %v434
    %v437 = vtanh.pop %v436
    %439 = vrot.lane.b32.xlu0 %v437, 64
    %v440 = vpop.permute.xlu0 %439
    %v442 = vmul.f32 %v421, %v440
    %v443 = vpack.c.bf16 %v442, %v442
    %v444 = vld [vmem:[#allocation11 + $0x18] sm:$0xf]
    %v445 = vld [vmem:[#allocation11 + $0x1c] sm:$0xf]
    %v446 = vld [vmem:[#allocation11 + $0x20] sm:$0xf]
    %v447 = vld [vmem:[#allocation11 + $0x24] sm:$0xf]
    %449 = vrot.lane.b32.xlu0 %v443, 32
    %v450 = vpop.permute.xlu0 %449
    %v455 = vunpack.c.l.b16 %v444
    %v456 = vunpack.c.l.b16 %v445
    %v457 = vunpack.c.l.b16 %v446
    %v458 = vunpack.c.l.b16 %v447
    %v459 = vpack.c.b16 %v456, %v455
    %v460 = vpack.c.b16 %v458, %v457
    %v464 = vsel %vm177, %v450, 0
    %466 = vmatprep.subr.bf16.mxu0 0
    %467 = vmatpush1.bf16.msra.mxu0 %v459
    %468 = vmatprep.subr.bf16.mxu0 0
    %469 = vmatpush1.bf16.msra.mxu0 %v460
    %470 = vmatprep.subr.bf16.mxu0 0
    %471 = vmatpush1.bf16.msra.mxu0 0
    %472 = vmatprep.subr.bf16.mxu0 0
    %473 = vmatpush1.bf16.msra.mxu0 0
    %474 = vmatprep.subr.bf16.mxu0 0
    %475 = vmatpush1.bf16.msra.mxu0 0
    %476 = vmatprep.subr.bf16.mxu0 0
    %477 = vmatpush1.bf16.msra.mxu0 0
    %478 = vmatprep.subr.bf16.mxu0 0
    %479 = vmatpush1.bf16.msra.mxu0 0
    %480 = vmatprep.subr.bf16.mxu0 0
    %481 = vmatpush1.bf16.msra.mxu0 0
    %482 = vmatprep.subr.bf16.mxu0 0
    %483 = vmatpush1.bf16.msra.mxu0 0
    %484 = vmatprep.subr.bf16.mxu0 0
    %485 = vmatpush1.bf16.msra.mxu0 0
    %486 = vmatprep.subr.bf16.mxu0 0
    %487 = vmatpush1.bf16.msra.mxu0 0
    %488 = vmatprep.subr.bf16.mxu0 0
    %489 = vmatpush1.bf16.msra.mxu0 0
    %490 = vmatprep.subr.bf16.mxu0 0
    %491 = vmatpush1.bf16.msra.mxu0 0
    %492 = vmatprep.subr.bf16.mxu0 0
    %493 = vmatpush1.bf16.msra.mxu0 0
    %494 = vmatprep.subr.bf16.mxu0 0
    %495 = vmatpush1.bf16.msra.mxu0 0
    %496 = vmatprep.subr.bf16.mxu0 0
    %497 = vmatpush1.bf16.msra.mxu0 0
    %498 = vmatprep.mubr.bf16.mxu0 0
    %499 = vmatmul.mubr.bf16.gmra.mrb[0].mxu0 %v464
    %v500 = vpop.f32.mrb[0].mxu0
    %v501 = vadd.f32 0.0, %v500
    %v502 = vpop.f32.mrb[0].mxu0
    %v503 = vpop.f32.mrb[0].mxu0
    %v504 = vpop.f32.mrb[0].mxu0
    %505 = vdwg.mxu0
    %v506 = vlaneseq
    %v507 = vshrl.u32 %v506, 7
    %v508 = vsub.s32 0, %v507
    %v509 = vrot.slane %v501, %v508
    %v510 = vadd.f32 %v509, %v341
    %v511 = vtanh.pop %v510
    %v512 = vpack.c.bf16 %v511, %v511
    %513 = vmatprep.subr.bf16.mxu0 0
    %514 = vmatpush1.bf16.xpose.msra.mxu0 %v512
    %515 = vmatprep.subr.bf16.mxu0 0
    %516 = vmatpush1.bf16.xpose.msra.mxu0 0
    %517 = vmatprep.subr.bf16.mxu0 0
    %518 = vmatpush1.bf16.xpose.msra.mxu0 0
    %519 = vmatprep.subr.bf16.mxu0 0
    %520 = vmatpush1.bf16.xpose.msra.mxu0 0
    %521 = vmatprep.subr.bf16.mxu0 0
    %522 = vmatpush1.bf16.xpose.msra.mxu0 0
    %523 = vmatprep.subr.bf16.mxu0 0
    %524 = vmatpush1.bf16.xpose.msra.mxu0 0
    %525 = vmatprep.subr.bf16.mxu0 0
    %526 = vmatpush1.bf16.xpose.msra.mxu0 0
    %527 = vmatprep.subr.bf16.mxu0 0
    %528 = vmatpush1.bf16.xpose.msra.mxu0 0
    %529 = vmatprep.subr.bf16.mxu0 0
    %530 = vmatpush1.bf16.xpose.msra.mxu0 0
    %531 = vmatprep.subr.bf16.mxu0 0
    %532 = vmatpush1.bf16.xpose.msra.mxu0 0
    %533 = vmatprep.subr.bf16.mxu0 0
    %534 = vmatpush1.bf16.xpose.msra.mxu0 0
    %535 = vmatprep.subr.bf16.mxu0 0
    %536 = vmatpush1.bf16.xpose.msra.mxu0 0
    %537 = vmatprep.subr.bf16.mxu0 0
    %538 = vmatpush1.bf16.xpose.msra.mxu0 0
    %539 = vmatprep.subr.bf16.mxu0 0
    %540 = vmatpush1.bf16.xpose.msra.mxu0 0
    %541 = vmatprep.subr.bf16.mxu0 0
    %542 = vmatpush1.bf16.xpose.msra.mxu0 0
    %543 = vmatprep.subr.bf16.mxu0 0
    %544 = vmatpush1.bf16.xpose.msra.mxu0 0
    %545 = vmatprep.mubr.bf16.mxu0 0
    %546 = vmatmul.mubr.bf16.gmra.mrb[0].mxu0 %v98
    %v547 = vpop.f32.mrb[0].mxu0
    %v548 = vadd.f32 0.0, %v547
    %v549 = vpop.f32.mrb[0].mxu0
    %v550 = vpop.f32.mrb[0].mxu0
    %v551 = vpop.f32.mrb[0].mxu0
    %552 = vdwg.mxu0
    %vm553 = vcmask 57344
    %v554 = vsel %vm553, %v548, -inf
    %555 = vmax.xlane.f32.xlu0 %v554
    %v556 = vpop.xlane.xlu0 %555
    %v557 = vsub.f32 %v548, %v556
    %v558 = vmul.f32 %v557, 1.442695
    %v559 = vpow.pop %v558
    %v560 = vsel %vm553, %v559, 0.0
    %561 = vadd.xlane.f32.xlu0 %v560
    %v562 = vpop.xlane.xlu0 %561
    %v563 = vrcp.pop %v562
    %v564 = vmul.f32 %v559, %v563
    %vm565 = vcmask 64512
    %v566 = vsel %vm565, %v564, 0.0
    %567 = vst [vmem:[#allocation13] sm:$0x1] %v566
    %v568 = vpack.c.bf16 %v564, %v564
    %v570 = vsel %vm565, %v568, 0
    %vm572 = vcmask 1043456
    %v573 = vsel %vm572, %v99, 0
    %575 = vmatprep.subr.bf16.mxu0 0
    %576 = vmatpush1.bf16.msra.mxu0 %v573
    %577 = vmatprep.subr.bf16.mxu0 0
    %578 = vmatpush1.bf16.msra.mxu0 0
    %579 = vmatprep.subr.bf16.mxu0 0
    %580 = vmatpush1.bf16.msra.mxu0 0
    %581 = vmatprep.subr.bf16.mxu0 0
    %582 = vmatpush1.bf16.msra.mxu0 0
    %583 = vmatprep.subr.bf16.mxu0 0
    %584 = vmatpush1.bf16.msra.mxu0 0
    %585 = vmatprep.subr.bf16.mxu0 0
    %586 = vmatpush1.bf16.msra.mxu0 0
    %587 = vmatprep.subr.bf16.mxu0 0
    %588 = vmatpush1.bf16.msra.mxu0 0
    %589 = vmatprep.subr.bf16.mxu0 0
    %590 = vmatpush1.bf16.msra.mxu0 0
    %591 = vmatprep.subr.bf16.mxu0 0
    %592 = vmatpush1.bf16.msra.mxu0 0
    %593 = vmatprep.subr.bf16.mxu0 0
    %594 = vmatpush1.bf16.msra.mxu0 0
    %595 = vmatprep.subr.bf16.mxu0 0
    %596 = vmatpush1.bf16.msra.mxu0 0
    %597 = vmatprep.subr.bf16.mxu0 0
    %598 = vmatpush1.bf16.msra.mxu0 0
    %599 = vmatprep.subr.bf16.mxu0 0
    %600 = vmatpush1.bf16.msra.mxu0 0
    %601 = vmatprep.subr.bf16.mxu0 0
    %602 = vmatpush1.bf16.msra.mxu0 0
    %603 = vmatprep.subr.bf16.mxu0 0
    %604 = vmatpush1.bf16.msra.mxu0 0
    %605 = vmatprep.subr.bf16.mxu0 0
    %606 = vmatpush1.bf16.msra.mxu0 0
    %607 = vmatprep.mubr.bf16.mxu0 0
    %608 = vmatmul.mubr.bf16.gmra.mrb[0].mxu0 %v570
    %v609 = vpop.f32.mrb[0].mxu0
    %v610 = vadd.f32 0.0, %v609
    %v611 = vpop.f32.mrb[0].mxu0
    %v612 = vpop.f32.mrb[0].mxu0
    %v613 = vpop.f32.mrb[0].mxu0
    %614 = vdwg.mxu0
    %v615 = vpack.c.bf16 %v610, %v610
    %v616 = vld [vmem:[#allocation9 + $0x20] sm:$0xf]
    %v617 = vld [vmem:[#allocation9 + $0x24] sm:$0xf]
    %v618 = vld [vmem:[#allocation9 + $0x28] sm:$0xf]
    %v619 = vld [vmem:[#allocation9 + $0x2c] sm:$0xf]
    %v620 = vld [vmem:[#allocation9 + $0x30] sm:$0xf]
    %v621 = vld [vmem:[#allocation9 + $0x34] sm:$0xf]
    %v622 = vld [vmem:[#allocation9 + $0x38] sm:$0xf]
    %v623 = vld [vmem:[#allocation9 + $0x3c] sm:$0xf]
    %v628 = vunpack.c.l.b16 %v620
    %v629 = vunpack.c.l.b16 %v621
    %v630 = vunpack.c.l.b16 %v622
    %v631 = vunpack.c.l.b16 %v623
    %v632 = vpack.c.b16 %v629, %v628
    %v633 = vpack.c.b16 %v631, %v630
    %v637 = vsel %vm177, %v615, 0
    %639 = vmatprep.subr.bf16.mxu0 0
    %640 = vmatpush1.bf16.msra.mxu0 %v632
    %641 = vmatprep.subr.bf16.mxu0 0
    %642 = vmatpush1.bf16.msra.mxu0 %v633
    %643 = vmatprep.subr.bf16.mxu0 0
    %644 = vmatpush1.bf16.msra.mxu0 0
    %645 = vmatprep.subr.bf16.mxu0 0
    %646 = vmatpush1.bf16.msra.mxu0 0
    %647 = vmatprep.subr.bf16.mxu0 0
    %648 = vmatpush1.bf16.msra.mxu0 0
    %649 = vmatprep.subr.bf16.mxu0 0
    %650 = vmatpush1.bf16.msra.mxu0 0
    %651 = vmatprep.subr.bf16.mxu0 0
    %652 = vmatpush1.bf16.msra.mxu0 0
    %653 = vmatprep.subr.bf16.mxu0 0
    %654 = vmatpush1.bf16.msra.mxu0 0
    %655 = vmatprep.subr.bf16.mxu0 0
    %656 = vmatpush1.bf16.msra.mxu0 0
    %657 = vmatprep.subr.bf16.mxu0 0
    %658 = vmatpush1.bf16.msra.mxu0 0
    %659 = vmatprep.subr.bf16.mxu0 0
    %660 = vmatpush1.bf16.msra.mxu0 0
    %661 = vmatprep.subr.bf16.mxu0 0
    %662 = vmatpush1.bf16.msra.mxu0 0
    %663 = vmatprep.subr.bf16.mxu0 0
    %664 = vmatpush1.bf16.msra.mxu0 0
    %665 = vmatprep.subr.bf16.mxu0 0
    %666 = vmatpush1.bf16.msra.mxu0 0
    %667 = vmatprep.subr.bf16.mxu0 0
    %668 = vmatpush1.bf16.msra.mxu0 0
    %669 = vmatprep.subr.bf16.mxu0 0
    %670 = vmatpush1.bf16.msra.mxu0 0
    %671 = vmatprep.mubr.bf16.mxu0 0
    %672 = vmatmul.mubr.bf16.gmra.mrb[0].mxu0 %v637
    %v673 = vpop.f32.mrb[0].mxu0
    %v674 = vadd.f32 0.0, %v673
    %v675 = vpop.f32.mrb[0].mxu0
    %v676 = vpop.f32.mrb[0].mxu0
    %v677 = vpop.f32.mrb[0].mxu0
    %678 = vdwg.mxu0
    %v683 = vunpack.c.l.b16 %v616
    %v684 = vunpack.c.l.b16 %v617
    %v685 = vunpack.c.l.b16 %v618
    %v686 = vunpack.c.l.b16 %v619
    %v687 = vpack.c.b16 %v684, %v683
    %v688 = vpack.c.b16 %v686, %v685
    %691 = vmatprep.subr.bf16.mxu0 0
    %692 = vmatpush1.bf16.msra.mxu0 %v687
    %693 = vmatprep.subr.bf16.mxu0 0
    %694 = vmatpush1.bf16.msra.mxu0 %v688
    %695 = vmatprep.subr.bf16.mxu0 0
    %696 = vmatpush1.bf16.msra.mxu0 0
    %697 = vmatprep.subr.bf16.mxu0 0
    %698 = vmatpush1.bf16.msra.mxu0 0
    %699 = vmatprep.subr.bf16.mxu0 0
    %700 = vmatpush1.bf16.msra.mxu0 0
    %701 = vmatprep.subr.bf16.mxu0 0
    %702 = vmatpush1.bf16.msra.mxu0 0
    %703 = vmatprep.subr.bf16.mxu0 0
    %704 = vmatpush1.bf16.msra.mxu0 0
    %705 = vmatprep.subr.bf16.mxu0 0
    %706 = vmatpush1.bf16.msra.mxu0 0
    %707 = vmatprep.subr.bf16.mxu0 0
    %708 = vmatpush1.bf16.msra.mxu0 0
    %709 = vmatprep.subr.bf16.mxu0 0
    %710 = vmatpush1.bf16.msra.mxu0 0
    %711 = vmatprep.subr.bf16.mxu0 0
    %712 = vmatpush1.bf16.msra.mxu0 0
    %713 = vmatprep.subr.bf16.mxu0 0
    %714 = vmatpush1.bf16.msra.mxu0 0
    %715 = vmatprep.subr.bf16.mxu0 0
    %716 = vmatpush1.bf16.msra.mxu0 0
    %717 = vmatprep.subr.bf16.mxu0 0
    %718 = vmatpush1.bf16.msra.mxu0 0
    %719 = vmatprep.subr.bf16.mxu0 0
    %720 = vmatpush1.bf16.msra.mxu0 0
    %721 = vmatprep.subr.bf16.mxu0 0
    %722 = vmatpush1.bf16.msra.mxu0 0
    %723 = vmatprep.mubr.bf16.mxu0 0
    %724 = vmatmul.mubr.bf16.gmra.mrb[0].mxu0 %v464
    %v725 = vpop.f32.mrb[0].mxu0
    %v726 = vadd.f32 %v674, %v725
    %v727 = vpop.f32.mrb[0].mxu0
    %v728 = vpop.f32.mrb[0].mxu0
    %v729 = vpop.f32.mrb[0].mxu0
    %730 = vdwg.mxu0
    %v731 = vpack.c.bf16 %v348, %v348
    %v732 = vld [vmem:[#allocation9 + $0x40] sm:$0xf]
    %v733 = vld [vmem:[#allocation9 + $0x44] sm:$0xf]
    %v734 = vld [vmem:[#allocation9 + $0x48] sm:$0xf]
    %v735 = vld [vmem:[#allocation9 + $0x4c] sm:$0xf]
    %v740 = vunpack.c.l.b16 %v732
    %v741 = vunpack.c.l.b16 %v733
    %v742 = vunpack.c.l.b16 %v734
    %v743 = vunpack.c.l.b16 %v735
    %v744 = vpack.c.b16 %v741, %v740
    %v745 = vpack.c.b16 %v743, %v742
    %v749 = vsel %vm177, %v731, 0
    %751 = vmatprep.subr.bf16.mxu0 0
    %752 = vmatpush1.bf16.msra.mxu0 %v744
    %753 = vmatprep.subr.bf16.mxu0 0
    %754 = vmatpush1.bf16.msra.mxu0 %v745
    %755 = vmatprep.subr.bf16.mxu0 0
    %756 = vmatpush1.bf16.msra.mxu0 0
    %757 = vmatprep.subr.bf16.mxu0 0
    %758 = vmatpush1.bf16.msra.mxu0 0
    %759 = vmatprep.subr.bf16.mxu0 0
    %760 = vmatpush1.bf16.msra.mxu0 0
    %761 = vmatprep.subr.bf16.mxu0 0
    %762 = vmatpush1.bf16.msra.mxu0 0
    %763 = vmatprep.subr.bf16.mxu0 0
    %764 = vmatpush1.bf16.msra.mxu0 0
    %765 = vmatprep.subr.bf16.mxu0 0
    %766 = vmatpush1.bf16.msra.mxu0 0
    %767 = vmatprep.subr.bf16.mxu0 0
    %768 = vmatpush1.bf16.msra.mxu0 0
    %769 = vmatprep.subr.bf16.mxu0 0
    %770 = vmatpush1.bf16.msra.mxu0 0
    %771 = vmatprep.subr.bf16.mxu0 0
    %772 = vmatpush1.bf16.msra.mxu0 0
    %773 = vmatprep.subr.bf16.mxu0 0
    %774 = vmatpush1.bf16.msra.mxu0 0
    %775 = vmatprep.subr.bf16.mxu0 0
    %776 = vmatpush1.bf16.msra.mxu0 0
    %777 = vmatprep.subr.bf16.mxu0 0
    %778 = vmatpush1.bf16.msra.mxu0 0
    %779 = vmatprep.subr.bf16.mxu0 0
    %780 = vmatpush1.bf16.msra.mxu0 0
    %781 = vmatprep.subr.bf16.mxu0 0
    %782 = vmatpush1.bf16.msra.mxu0 0
    %783 = vmatprep.mubr.bf16.mxu0 0
    %784 = vmatmul.mubr.bf16.gmra.mrb[0].mxu0 %v749
    %v785 = vpop.f32.mrb[0].mxu0
    %v786 = vadd.f32 0.0, %v785
    %v787 = vpop.f32.mrb[0].mxu0
    %v788 = vpop.f32.mrb[0].mxu0
    %v789 = vpop.f32.mrb[0].mxu0
    %790 = vdwg.mxu0
    %v791 = vadd.f32 %v726, %v786
    %v792 = vadd.f32 %v791, %v92
    %v793 = vtanh.pop %v792
    %v794 = vxor.u32 %v792, 2147483648
    %v795 = vmul.f32 %v794, 1.442695
    %v796 = vpow.pop %v795
    %v797 = vadd.f32 %v796, 1.0
    %v798 = vrcp.pop %v797
    %v799 = vmul.f32 1.0, %v798
    %v800 = vsel %vm104, %v793, %v799
    %802 = vrot.lane.b32.xlu0 %v349, 32
    %v803 = vpop.permute.xlu0 %802
    %v805 = vmul.f32 %v800, %v803
    %807 = vrot.lane.b32.xlu0 %v800, 64
    %v808 = vpop.permute.xlu0 %807
    %v810 = vmul.f32 %v800, %v808
    %812 = vrot.lane.b32.xlu0 %v810, 32
    %v813 = vpop.permute.xlu0 %812
    %v815 = vadd.f32 %v805, %v813
    %v816 = vtanh.pop %v815
    %818 = vrot.lane.b32.xlu0 %v816, 64
    %v819 = vpop.permute.xlu0 %818
    %v821 = vmul.f32 %v800, %v819
    %v822 = vadd.f32 %v821, %v442
    %v823 = vpack.c.bf16 %v822, %v822
    %v824 = vld [vmem:[#allocation9 + $0x50] sm:$0xf]
    %v825 = vld [vmem:[#allocation9 + $0x54] sm:$0xf]
    %v826 = vld [vmem:[#allocation9 + $0x58] sm:$0xf]
    %v827 = vld [vmem:[#allocation9 + $0x5c] sm:$0xf]
    %v828 = vadd.f32 %v610, %v610
    %v829 = vpack.c.bf16 %v828, %v828
    %v830 = vld [vmem:[#allocation9 + $0x60] sm:$0xf]
    %v831 = vld [vmem:[#allocation9 + $0x64] sm:$0xf]
    %v832 = vld [vmem:[#allocation9 + $0x68] sm:$0xf]
    %v833 = vld [vmem:[#allocation9 + $0x6c] sm:$0xf]
    %v838 = vunpack.c.l.b16 %v830
    %v839 = vunpack.c.l.b16 %v831
    %v840 = vunpack.c.l.b16 %v832
    %v841 = vunpack.c.l.b16 %v833
    %v842 = vpack.c.b16 %v839, %v838
    %v843 = vpack.c.b16 %v841, %v840
    %v847 = vsel %vm177, %v829, 0
    %849 = vmatprep.subr.bf16.mxu0 0
    %850 = vmatpush1.bf16.msra.mxu0 %v842
    %851 = vmatprep.subr.bf16.mxu0 0
    %852 = vmatpush1.bf16.msra.mxu0 %v843
    %853 = vmatprep.subr.bf16.mxu0 0
    %854 = vmatpush1.bf16.msra.mxu0 0
    %855 = vmatprep.subr.bf16.mxu0 0
    %856 = vmatpush1.bf16.msra.mxu0 0
    %857 = vmatprep.subr.bf16.mxu0 0
    %858 = vmatpush1.bf16.msra.mxu0 0
    %859 = vmatprep.subr.bf16.mxu0 0
    %860 = vmatpush1.bf16.msra.mxu0 0
    %861 = vmatprep.subr.bf16.mxu0 0
    %862 = vmatpush1.bf16.msra.mxu0 0
    %863 = vmatprep.subr.bf16.mxu0 0
    %864 = vmatpush1.bf16.msra.mxu0 0
    %865 = vmatprep.subr.bf16.mxu0 0
    %866 = vmatpush1.bf16.msra.mxu0 0
    %867 = vmatprep.subr.bf16.mxu0 0
    %868 = vmatpush1.bf16.msra.mxu0 0
    %869 = vmatprep.subr.bf16.mxu0 0
    %870 = vmatpush1.bf16.msra.mxu0 0
    %871 = vmatprep.subr.bf16.mxu0 0
    %872 = vmatpush1.bf16.msra.mxu0 0
    %873 = vmatprep.subr.bf16.mxu0 0
    %874 = vmatpush1.bf16.msra.mxu0 0
    %875 = vmatprep.subr.bf16.mxu0 0
    %876 = vmatpush1.bf16.msra.mxu0 0
    %877 = vmatprep.subr.bf16.mxu0 0
    %878 = vmatpush1.bf16.msra.mxu0 0
    %879 = vmatprep.subr.bf16.mxu0 0
    %880 = vmatpush1.bf16.msra.mxu0 0
    %881 = vmatprep.mubr.bf16.mxu0 0
    %882 = vmatmul.mubr.bf16.gmra.mrb[0].mxu0 %v847
    %v883 = vpop.f32.mrb[0].mxu0
    %v884 = vadd.f32 0.0, %v883
    %v885 = vpop.f32.mrb[0].mxu0
    %v886 = vpop.f32.mrb[0].mxu0
    %v887 = vpop.f32.mrb[0].mxu0
    %888 = vdwg.mxu0
    %890 = vrot.lane.b32.xlu0 %v823, 32
    %v891 = vpop.permute.xlu0 %890
    %v896 = vunpack.c.l.b16 %v824
    %v897 = vunpack.c.l.b16 %v825
    %v898 = vunpack.c.l.b16 %v826
    %v899 = vunpack.c.l.b16 %v827
    %v900 = vpack.c.b16 %v897, %v896
    %v901 = vpack.c.b16 %v899, %v898
    %v905 = vsel %vm177, %v891, 0
    %907 = vmatprep.subr.bf16.mxu0 0
    %908 = vmatpush1.bf16.msra.mxu0 %v900
    %909 = vmatprep.subr.bf16.mxu0 0
    %910 = vmatpush1.bf16.msra.mxu0 %v901
    %911 = vmatprep.subr.bf16.mxu0 0
    %912 = vmatpush1.bf16.msra.mxu0 0
    %913 = vmatprep.subr.bf16.mxu0 0
    %914 = vmatpush1.bf16.msra.mxu0 0
    %915 = vmatprep.subr.bf16.mxu0 0
    %916 = vmatpush1.bf16.msra.mxu0 0
    %917 = vmatprep.subr.bf16.mxu0 0
    %918 = vmatpush1.bf16.msra.mxu0 0
    %919 = vmatprep.subr.bf16.mxu0 0
    %920 = vmatpush1.bf16.msra.mxu0 0
    %921 = vmatprep.subr.bf16.mxu0 0
    %922 = vmatpush1.bf16.msra.mxu0 0
    %923 = vmatprep.subr.bf16.mxu0 0
    %924 = vmatpush1.bf16.msra.mxu0 0
    %925 = vmatprep.subr.bf16.mxu0 0
    %926 = vmatpush1.bf16.msra.mxu0 0
    %927 = vmatprep.subr.bf16.mxu0 0
    %928 = vmatpush1.bf16.msra.mxu0 0
    %929 = vmatprep.subr.bf16.mxu0 0
    %930 = vmatpush1.bf16.msra.mxu0 0
    %931 = vmatprep.subr.bf16.mxu0 0
    %932 = vmatpush1.bf16.msra.mxu0 0
    %933 = vmatprep.subr.bf16.mxu0 0
    %934 = vmatpush1.bf16.msra.mxu0 0
    %935 = vmatprep.subr.bf16.mxu0 0
    %936 = vmatpush1.bf16.msra.mxu0 0
    %937 = vmatprep.subr.bf16.mxu0 0
    %938 = vmatpush1.bf16.msra.mxu0 0
    %939 = vmatprep.mubr.bf16.mxu0 0
    %940 = vmatmul.mubr.bf16.gmra.mrb[0].mxu0 %v905
    %v941 = vpop.f32.mrb[0].mxu0
    %v942 = vadd.f32 %v884, %v941
    %v943 = vpop.f32.mrb[0].mxu0
    %v944 = vpop.f32.mrb[0].mxu0
    %v945 = vpop.f32.mrb[0].mxu0
    %946 = vdwg.mxu0
    %v947 = vpack.c.bf16 %v350, %v350
    %v948 = vld [vmem:[#allocation9 + $0x70] sm:$0xf]
    %v949 = vld [vmem:[#allocation9 + $0x74] sm:$0xf]
    %v950 = vld [vmem:[#allocation9 + $0x78] sm:$0xf]
    %v951 = vld [vmem:[#allocation9 + $0x7c] sm:$0xf]
    %v956 = vunpack.c.l.b16 %v948
    %v957 = vunpack.c.l.b16 %v949
    %v958 = vunpack.c.l.b16 %v950
    %v959 = vunpack.c.l.b16 %v951
    %v960 = vpack.c.b16 %v957, %v956
    %v961 = vpack.c.b16 %v959, %v958
    %v965 = vsel %vm177, %v947, 0
    %967 = vmatprep.subr.bf16.mxu0 0
    %968 = vmatpush1.bf16.msra.mxu0 %v960
    %969 = vmatprep.subr.bf16.mxu0 0
    %970 = vmatpush1.bf16.msra.mxu0 %v961
    %971 = vmatprep.subr.bf16.mxu0 0
    %972 = vmatpush1.bf16.msra.mxu0 0
    %973 = vmatprep.subr.bf16.mxu0 0
    %974 = vmatpush1.bf16.msra.mxu0 0
    %975 = vmatprep.subr.bf16.mxu0 0
    %976 = vmatpush1.bf16.msra.mxu0 0
    %977 = vmatprep.subr.bf16.mxu0 0
    %978 = vmatpush1.bf16.msra.mxu0 0
    %979 = vmatprep.subr.bf16.mxu0 0
    %980 = vmatpush1.bf16.msra.mxu0 0
    %981 = vmatprep.subr.bf16.mxu0 0
    %982 = vmatpush1.bf16.msra.mxu0 0
    %983 = vmatprep.subr.bf16.mxu0 0
    %984 = vmatpush1.bf16.msra.mxu0 0
    %985 = vmatprep.subr.bf16.mxu0 0
    %986 = vmatpush1.bf16.msra.mxu0 0
    %987 = vmatprep.subr.bf16.mxu0 0
    %988 = vmatpush1.bf16.msra.mxu0 0
    %989 = vmatprep.subr.bf16.mxu0 0
    %990 = vmatpush1.bf16.msra.mxu0 0
    %991 = vmatprep.subr.bf16.mxu0 0
    %992 = vmatpush1.bf16.msra.mxu0 0
    %993 = vmatprep.subr.bf16.mxu0 0
    %994 = vmatpush1.bf16.msra.mxu0 0
    %995 = vmatprep.subr.bf16.mxu0 0
    %996 = vmatpush1.bf16.msra.mxu0 0
    %997 = vmatprep.subr.bf16.mxu0 0
    %998 = vmatpush1.bf16.msra.mxu0 0
    %999 = vmatprep.mubr.bf16.mxu0 0
    %1000 = vmatmul.mubr.bf16.gmra.mrb[0].mxu0 %v965
    %v1001 = vpop.f32.mrb[0].mxu0
    %v1002 = vadd.f32 0.0, %v1001
    %v1003 = vpop.f32.mrb[0].mxu0
    %v1004 = vpop.f32.mrb[0].mxu0
    %v1005 = vpop.f32.mrb[0].mxu0
    %1006 = vdwg.mxu0
    %v1007 = vadd.f32 %v942, %v1002
    %v1008 = vadd.f32 %v1007, %v93
    %v1009 = vtanh.pop %v1008
    %v1010 = vxor.u32 %v1008, 2147483648
    %v1011 = vmul.f32 %v1010, 1.442695
    %v1012 = vpow.pop %v1011
    %v1013 = vadd.f32 %v1012, 1.0
    %v1014 = vrcp.pop %v1013
    %v1015 = vmul.f32 1.0, %v1014
    %v1016 = vsel %vm104, %v1009, %v1015
    %1018 = vrot.lane.b32.xlu0 %v351, 32
    %v1019 = vpop.permute.xlu0 %1018
    %v1021 = vmul.f32 %v1016, %v1019
    %1023 = vrot.lane.b32.xlu0 %v1016, 64
    %v1024 = vpop.permute.xlu0 %1023
    %v1026 = vmul.f32 %v1016, %v1024
    %1028 = vrot.lane.b32.xlu0 %v1026, 32
    %v1029 = vpop.permute.xlu0 %1028
    %v1031 = vadd.f32 %v1021, %v1029
    %v1032 = vtanh.pop %v1031
    %1034 = vrot.lane.b32.xlu0 %v1032, 64
    %v1035 = vpop.permute.xlu0 %1034
    %v1037 = vmul.f32 %v1016, %v1035
    %v1038 = vpack.c.bf16 %v1037, %v1037
    %v1039 = vld [vmem:[#allocation9 + $0x80] sm:$0xf]
    %v1040 = vld [vmem:[#allocation9 + $0x84] sm:$0xf]
    %v1041 = vld [vmem:[#allocation9 + $0x88] sm:$0xf]
    %v1042 = vld [vmem:[#allocation9 + $0x8c] sm:$0xf]
    %1044 = vrot.lane.b32.xlu0 %v1038, 32
    %v1045 = vpop.permute.xlu0 %1044
    %v1050 = vunpack.c.l.b16 %v1039
    %v1051 = vunpack.c.l.b16 %v1040
    %v1052 = vunpack.c.l.b16 %v1041
    %v1053 = vunpack.c.l.b16 %v1042
    %v1054 = vpack.c.b16 %v1051, %v1050
    %v1055 = vpack.c.b16 %v1053, %v1052
    %v1059 = vsel %vm177, %v1045, 0
    %1061 = vmatprep.subr.bf16.mxu0 0
    %1062 = vmatpush1.bf16.msra.mxu0 %v1054
    %1063 = vmatprep.subr.bf16.mxu0 0
    %1064 = vmatpush1.bf16.msra.mxu0 %v1055
    %1065 = vmatprep.subr.bf16.mxu0 0
    %1066 = vmatpush1.bf16.msra.mxu0 0
    %1067 = vmatprep.subr.bf16.mxu0 0
    %1068 = vmatpush1.bf16.msra.mxu0 0
    %1069 = vmatprep.subr.bf16.mxu0 0
    %1070 = vmatpush1.bf16.msra.mxu0 0
    %1071 = vmatprep.subr.bf16.mxu0 0
    %1072 = vmatpush1.bf16.msra.mxu0 0
    %1073 = vmatprep.subr.bf16.mxu0 0
    %1074 = vmatpush1.bf16.msra.mxu0 0
    %1075 = vmatprep.subr.bf16.mxu0 0
    %1076 = vmatpush1.bf16.msra.mxu0 0
    %1077 = vmatprep.subr.bf16.mxu0 0
    %1078 = vmatpush1.bf16.msra.mxu0 0
    %1079 = vmatprep.subr.bf16.mxu0 0
    %1080 = vmatpush1.bf16.msra.mxu0 0
    %1081 = vmatprep.subr.bf16.mxu0 0
    %1082 = vmatpush1.bf16.msra.mxu0 0
    %1083 = vmatprep.subr.bf16.mxu0 0
    %1084 = vmatpush1.bf16.msra.mxu0 0
    %1085 = vmatprep.subr.bf16.mxu0 0
    %1086 = vmatpush1.bf16.msra.mxu0 0
    %1087 = vmatprep.subr.bf16.mxu0 0
    %1088 = vmatpush1.bf16.msra.mxu0 0
    %1089 = vmatprep.subr.bf16.mxu0 0
    %1090 = vmatpush1.bf16.msra.mxu0 0
    %1091 = vmatprep.subr.bf16.mxu0 0
    %1092 = vmatpush1.bf16.msra.mxu0 0
    %1093 = vmatprep.mubr.bf16.mxu0 0
    %1094 = vmatmul.mubr.bf16.gmra.mrb[0].mxu0 %v1059
    %v1095 = vpop.f32.mrb[0].mxu0
    %v1096 = vadd.f32 %v97, %v1095
    %v1097 = vpop.f32.mrb[0].mxu0
    %v1098 = vpop.f32.mrb[0].mxu0
    %v1099 = vpop.f32.mrb[0].mxu0
    %1100 = vdwg.mxu0
    %1101 = vst [vmem:[#allocation12] sm:$0x1] %v1096
    %v1103 = vrot.slane %v436, 7
    %1104 = vrot.lane.b32.xlu0 %v1103, 64
    %v1105 = vpop.permute.xlu0 %1104
    %v1108 = vrot.slane %v821, 6
    %v1111 = vrot.slane %v815, 5
    %1112 = vrot.lane.b32.xlu0 %v1111, 64
    %v1113 = vpop.permute.xlu0 %1112
    %v1116 = vrot.slane %v1037, 4
    %v1119 = vrot.slane %v1031, 3
    %1120 = vrot.lane.b32.xlu0 %v1119, 64
    %v1121 = vpop.permute.xlu0 %1120
    %vm1123 = vcmask 1040384
    %v1124 = vsel %vm1123, %v442, %v1105
    %vm1125 = vcmask 1041408
    %v1126 = vsel %vm1125, %v1124, %v1108
    %vm1127 = vcmask 1042432
    %v1128 = vsel %vm1127, %v1126, %v1113
    %v1129 = vsel %vm572, %v1128, %v1116
    %vm1130 = vcmask 1044480
    %v1131 = vsel %vm1130, %v1129, %v1121
    %vm1132 = vcmask 1045504
    %v1133 = vsel %vm1132, %v1131, 0.0
    %1135 = vrot.lane.b32.xlu0 %v1133, 32
    %v1136 = vpop.permute.xlu0 %1135
    %1138 = vst.msk [vmem:[#allocation15] sm:$0xff] %vm177, %v1136
    // Predicated region
    $region46: #{tpu_custom_call.1} parent=1 // pred_check
      _
    $region47: #{tpu_custom_call.1} parent=1 // pred_check_branch
      %1140 = sbr.rel (0) target = $region49
    $region48: #{tpu_custom_call.1} parent=1 // pred_region
      %s1142 = ssub.s32 16, 16
      %1143 = vsyncadd [#allocation5], %s1142
      %s1145 = sshll.u32 [#allocation12], 4
      %s1146 = int_to_ptr.vmem [resolvable:$true] %s1145
      %1148 = dma.vmem_to_hbm [thread:$0]  %s1146, 16, %s6, [#allocation5]
    $region49: #{tpu_custom_call.1} parent=1 // pred_fallthru
      _
    // Predicated region
    $region50: #{tpu_custom_call.1} parent=1 // pred_check
      _
    $region51: #{tpu_custom_call.1} parent=1 // pred_check_branch
      %1150 = sbr.rel (0) target = $region53
    $region52: #{tpu_custom_call.1} parent=1 // pred_region
      %s1152 = ssub.s32 16, 16
      %1153 = vsyncadd [#allocation14], %s1152
      %s1155 = sshll.u32 [#allocation13], 4
      %s1156 = int_to_ptr.vmem [resolvable:$true] %s1155
      %1158 = dma.vmem_to_hbm [thread:$0]  %s1156, 16, %s7, [#allocation14]
    $region53: #{tpu_custom_call.1} parent=1 // pred_fallthru
      _
    // Predicated region
    $region54: #{tpu_custom_call.1} parent=1 // pred_check
      _
    $region55: #{tpu_custom_call.1} parent=1 // pred_check_branch
      %1160 = sbr.rel (0) target = $region57
    $region56: #{tpu_custom_call.1} parent=1 // pred_region
      %s1162 = ssub.s32 128, 128
      %1163 = vsyncadd [#allocation14], %s1162
      %s1165 = sshll.u32 [#allocation15], 4
      %s1166 = int_to_ptr.vmem [resolvable:$true] %s1165
      %1168 = dma.vmem_to_hbm [thread:$0]  %s1166, 128, %s8, [#allocation14]
    $region57: #{tpu_custom_call.1} parent=1 // pred_fallthru
      _
    // Predicated region
    $region58: #{tpu_custom_call.1} parent=1 // pred_check
      _
    $region59: #{tpu_custom_call.1} parent=1 // pred_check_branch
      %1170 = sbr.rel (0) target = $region61
    $region60: #{tpu_custom_call.1} parent=1 // pred_region
      %1171 = dma.done [#allocation5], 16
    $region61: #{tpu_custom_call.1} parent=1 // pred_fallthru
      _
    // Predicated region
    $region62: #{tpu_custom_call.1} parent=1 // pred_check
      _
    $region63: #{tpu_custom_call.1} parent=1 // pred_check_branch
      %1173 = sbr.rel (0) target = $region65
    $region64: #{tpu_custom_call.1} parent=1 // pred_region
      %1174 = dma.done [#allocation14], 16
    $region65: #{tpu_custom_call.1} parent=1 // pred_fallthru
      _
    // Predicated region
    $region66: #{tpu_custom_call.1} parent=1 // pred_check
      _
    $region67: #{tpu_custom_call.1} parent=1 // pred_check_branch
      %1176 = sbr.rel (0) target = $region69
    $region68: #{tpu_custom_call.1} parent=1 // pred_region
      %1177 = dma.done [#allocation14], 128
    $region69: #{tpu_custom_call.1} parent=1 // pred_fallthru
      _
    %1178 = vsyncpa [#allocation4], 1
    %1179 = vsyncpa [#allocation7], 1
    %1180 = vsyncpa [#allocation10], 1
    %1181 = vsyncpa [#allocation5], 1
    %1182 = vsyncpa [#allocation14], 1

</llo_original>
